<compile_context>
chip_gen: v6e
topology: v6e:2x2x1
jax: 0.10.0
libtpu: 0.0.40
codegen_flags: <defaults>
</compile_context>

<pallas_src>
import jax
import jax.numpy as jnp
from jax.experimental import pallas as pl
from jax.experimental.pallas import tpu as pltpu

# ----- model hyper-parameters (NBeatsStack, basis='generic', small dims) -----
INPUT_SIZE = 16    # flattened input length (generic basis)
HIDDEN = 32        # block_hidden
N_LAYERS = 4       # fc layers per block
NUM_BLOCKS = 3
THETA_PAD = 24     # backcast (16) + forecast (1) rows, padded to sublane mult.


def _make_kernel(act_dtype):
    """Build the kernel with a compile-time activation dtype (bf16 or f32)."""

    def nbeats_stack_kernel(x_ref, w_in_ref, b_in_ref, w_hid_ref, b_hid_ref,
                            w_theta_ref, b_theta_ref, out_ref):
        # x_ref:   (TILE_B, INPUT_SIZE)  natural layout
        # out_ref: (1, TILE_B)           lane-dense forecast row
        # In-kernel transpose puts batch on the 128-wide lane axis (XLU work).
        residual = x_ref[...].T.astype(jnp.float32)                 # (IN, TB)
        forecast = jnp.zeros((1, residual.shape[1]), jnp.float32)   # (1,  TB)

        for blk in range(NUM_BLOCKS):
            # first FC: (HIDDEN, INPUT_SIZE) @ (INPUT_SIZE, TILE_B)
            h = jnp.dot(w_in_ref[blk],
                        residual.astype(jnp.bfloat16),
                        preferred_element_type=jnp.float32)
            h = jnp.maximum(h.astype(act_dtype) + b_in_ref[blk], 0.0)
            # remaining FC layers: (HIDDEN, HIDDEN) @ (HIDDEN, TILE_B)
            for l in range(N_LAYERS - 1):
                h = jnp.dot(w_hid_ref[blk, l],
                            h.astype(jnp.bfloat16),
                            preferred_element_type=jnp.float32)
                h = jnp.maximum(h.astype(act_dtype) + b_hid_ref[blk, l], 0.0)
            # fused theta projection: (THETA_PAD, HIDDEN) @ (HIDDEN, TILE_B)
            theta = jnp.dot(w_theta_ref[blk],
                            h.astype(jnp.bfloat16),
                            preferred_element_type=jnp.float32) + b_theta_ref[blk]
            # sublane slices: rows 0:16 backcast, row 16 forecast
            residual = residual - theta[:INPUT_SIZE]
            forecast = forecast + theta[INPUT_SIZE:INPUT_SIZE + 1]

        out_ref[...] = forecast.astype(out_ref.dtype)

    return nbeats_stack_kernel


def _device_kind():
    try:
        return jax.devices()[0].device_kind.lower()
    except Exception:
        return ""


def _round_up(n, m):
    return ((n + m - 1) // m) * m


def nbeats_stack(x, params):
    """x: (B, INPUT_SIZE) f32  ->  forecast (B, 1) f32."""
    w_in, b_in, w_hid, b_hid, w_theta, b_theta = params
    bsz, in_size = x.shape
    assert in_size == INPUT_SIZE

    kind = _device_kind()
    n_cores = 2 if "v7" in kind else 1                  # dual-TC on v7x
    act_dtype = jnp.bfloat16 if ("v6" in kind or "v7" in kind) else jnp.float32

    # ---- per-generation batch tiling -------------------------------------
    b_pad = _round_up(max(bsz, 128), 128)
    per_core = -(-b_pad // n_cores)                     # keep grid >= n_cores
    tile_b = max(128, (min(512, per_core) // 128) * 128)
    b_pad = _round_up(b_pad, tile_b)
    grid = b_pad // tile_b

    if b_pad != bsz:
        x = jnp.pad(x, ((0, b_pad - bsz), (0, 0)))

    # hidden-layer biases in the activation dtype; theta bias stays f32
    b_in_a = b_in.astype(act_dtype)
    b_hid_a = b_hid.astype(act_dtype)

    # parameters: whole-array VMEM resident, no pipelining / double buffering
    vmem_spec = pl.BlockSpec(memory_space=pltpu.MemorySpace.VMEM)

    out_t = pl.pallas_call(
        _make_kernel(act_dtype),
        out_shape=jax.ShapeDtypeStruct((1, b_pad), jnp.float32),
        grid=(grid,),
        in_specs=[
            pl.BlockSpec((tile_b, INPUT_SIZE), lambda i: (i, 0)),  # x tile
            vmem_spec, vmem_spec,            # w_in, b_in
            vmem_spec, vmem_spec,            # w_hid, b_hid
            vmem_spec, vmem_spec,            # w_theta, b_theta
        ],
        out_specs=pl.BlockSpec((1, tile_b), lambda i: (0, i)),
        compiler_params=pltpu.CompilerParams(
            dimension_semantics=("parallel",)),
    )(x, w_in, b_in_a, w_hid, b_hid_a, w_theta, b_theta)

    # (1, b_pad) -> (bsz, 1): slice off padding; reshape is a free bitcast
    return out_t[0, :bsz].reshape(bsz, 1)


def init_params(key):
    """Deterministic synthetic parameters.

    Weights are in PyTorch (out_features, in_features) layout, stacked per
    block, stored in bf16 (MXU inputs). Biases are f32 column vectors
    (out_features, 1) so they broadcast along the lane/batch axis. The last
    FC (backcast + forecast) is fused into one padded theta projection.
    """
    ks = jax.random.split(key, 8)
    scale = 0.1
    f32 = jnp.float32
    w_in = (scale * jax.random.normal(ks[0], (NUM_BLOCKS, HIDDEN, INPUT_SIZE))
            ).astype(jnp.bfloat16)
    b_in = scale * jax.random.normal(ks[1], (NUM_BLOCKS, HIDDEN, 1), f32)
    w_hid = (scale * jax.random.normal(
        ks[2], (NUM_BLOCKS, N_LAYERS - 1, HIDDEN, HIDDEN))).astype(jnp.bfloat16)
    b_hid = scale * jax.random.normal(
        ks[3], (NUM_BLOCKS, N_LAYERS - 1, HIDDEN, 1), f32)
    w_back = scale * jax.random.normal(ks[4], (NUM_BLOCKS, INPUT_SIZE, HIDDEN), f32)
    b_back = scale * jax.random.normal(ks[5], (NUM_BLOCKS, INPUT_SIZE, 1), f32)
    w_fore = scale * jax.random.normal(ks[6], (NUM_BLOCKS, 1, HIDDEN), f32)
    b_fore = scale * jax.random.normal(ks[7], (NUM_BLOCKS, 1, 1), f32)

    # fuse backcast/forecast projection: rows 0:16 backcast, row 16 forecast,
    # rows 17:24 zero padding (never read).
    w_theta = jnp.zeros((NUM_BLOCKS, THETA_PAD, HIDDEN), f32)
    w_theta = w_theta.at[:, :INPUT_SIZE].set(w_back)
    w_theta = w_theta.at[:, INPUT_SIZE:INPUT_SIZE + 1].set(w_fore)
    w_theta = w_theta.astype(jnp.bfloat16)
    b_theta = jnp.zeros((NUM_BLOCKS, THETA_PAD, 1), f32)
    b_theta = b_theta.at[:, :INPUT_SIZE].set(b_back)
    b_theta = b_theta.at[:, INPUT_SIZE:INPUT_SIZE + 1].set(b_fore)

    return w_in, b_in, w_hid, b_hid, w_theta, b_theta


def nbeats_stack_ref(x, params):
    """Pure-JAX f32 reference matching the PyTorch forward semantics."""
    w_in, b_in, w_hid, b_hid, w_theta, b_theta = params
    f32 = lambda a: a.astype(jnp.float32)
    residual = f32(x).T                               # (INPUT_SIZE, B)
    forecast = jnp.zeros((1, x.shape[0]), jnp.float32)
    for blk in range(NUM_BLOCKS):
        h = jnp.maximum(f32(w_in[blk]) @ residual + f32(b_in[blk]), 0.0)
        for l in range(N_LAYERS - 1):
            h = jnp.maximum(f32(w_hid[blk, l]) @ h + f32(b_hid[blk, l]), 0.0)
        theta = f32(w_theta[blk]) @ h + b_theta[blk]
        residual = residual - theta[:INPUT_SIZE]
        forecast = forecast + theta[INPUT_SIZE:INPUT_SIZE + 1]
    return forecast.T                                 # (B, 1)


if __name__ == "__main__":
    key = jax.random.PRNGKey(0)
    k_x, k_p = jax.random.split(key)
    params = init_params(k_p)

    # small inference batch (exercises batch padding) + throughput batch
    for bsz in (8, 512):
        x = jax.random.normal(jax.random.fold_in(k_x, bsz),
                              (bsz, INPUT_SIZE), jnp.float32)
        out = jax.block_until_ready(nbeats_stack(x, params))
        ref = nbeats_stack_ref(x, params)
        assert out.shape == (bsz, 1)
        # bf16 MXU inputs (and bf16 activations on v6e/v7x) vs f32 reference
        assert jnp.allclose(out, ref, atol=3e-2, rtol=3e-2), (
            bsz, float(jnp.max(jnp.abs(out - ref))))

    # TODO(synk): 'trend'/'seasonal' bases (basis-matrix expansion) not wired; stack default is 'generic'.
    print("KERNEL_OK")
</pallas_src>

<mosaic_0001>
module attributes {stable_mosaic.version = 11 : i64} {
  func.func @nbeats_stack_kernel(%arg0: i32, %arg1: memref<128x16xf32, #tpu.memory_space<vmem>>, %arg2: memref<3x32x16xbf16, #tpu.memory_space<vmem>>, %arg3: memref<3x32x1xf32, #tpu.memory_space<vmem>>, %arg4: memref<3x3x32x32xbf16, #tpu.memory_space<vmem>>, %arg5: memref<3x3x32x1xf32, #tpu.memory_space<vmem>>, %arg6: memref<3x24x32xbf16, #tpu.memory_space<vmem>>, %arg7: memref<3x24x1xf32, #tpu.memory_space<vmem>>, %arg8: memref<1x128xf32, #tpu.memory_space<vmem>>) attributes {dimension_semantics = [#tpu.dimension_semantics<parallel>], iteration_bounds = array<i64: 1>, scalar_prefetch = 0 : i64, scratch_operands = 0 : i64, tpu.core_type = #tpu.core_type<tc>, window_params = [{transform_indices = @transform_0, window_bounds = array<i64: 128, 16>}, {pipeline_mode = #tpu.pipeline_mode<synchronous>, transform_indices = @transform_1, window_bounds = array<i64: 3, 32, 16>}, {pipeline_mode = #tpu.pipeline_mode<synchronous>, transform_indices = @transform_2, window_bounds = array<i64: 3, 32, 1>}, {pipeline_mode = #tpu.pipeline_mode<synchronous>, transform_indices = @transform_3, window_bounds = array<i64: 3, 3, 32, 32>}, {pipeline_mode = #tpu.pipeline_mode<synchronous>, transform_indices = @transform_4, window_bounds = array<i64: 3, 3, 32, 1>}, {pipeline_mode = #tpu.pipeline_mode<synchronous>, transform_indices = @transform_5, window_bounds = array<i64: 3, 24, 32>}, {pipeline_mode = #tpu.pipeline_mode<synchronous>, transform_indices = @transform_6, window_bounds = array<i64: 3, 24, 1>}, {transform_indices = @transform_7, window_bounds = array<i64: 1, 128>}]} {
    %c0 = arith.constant 0 : index
    %c0_0 = arith.constant 0 : index
    %0 = vector.load %arg1[%c0, %c0_0] : memref<128x16xf32, #tpu.memory_space<vmem>>, vector<128x16xf32>
    %1 = tpu.transpose %0, [1, 0] : vector<128x16xf32> -> vector<16x128xf32>
    %cst = arith.constant 0.000000e+00 : f32
    %2 = vector.broadcast %cst : f32 to vector<1x128xf32>
    %c0_1 = arith.constant 0 : index
    %c0_2 = arith.constant 0 : index
    %c0_3 = arith.constant 0 : index
    %3 = vector.load %arg2[%c0_1, %c0_2, %c0_3] : memref<3x32x16xbf16, #tpu.memory_space<vmem>>, vector<1x32x16xbf16>
    %4 = vector.shape_cast %3 : vector<1x32x16xbf16> to vector<32x16xbf16>
    %5 = arith.truncf %1 : vector<16x128xf32> to vector<16x128xbf16>
    %cst_4 = arith.constant dense<0.000000e+00> : vector<32x128xf32>
    %6 = tpu.matmul %4, %5, %cst_4 {dimension_numbers = #tpu.dot_dimension_numbers<[1], [0], [0], [1], [0, 0, 1, 1], [], []>} : vector<32x16xbf16>, vector<16x128xbf16>, vector<32x128xf32> -> vector<32x128xf32>
    %c0_5 = arith.constant 0 : index
    %c0_6 = arith.constant 0 : index
    %c0_7 = arith.constant 0 : index
    %7 = vector.load %arg3[%c0_5, %c0_6, %c0_7] : memref<3x32x1xf32, #tpu.memory_space<vmem>>, vector<1x32x1xf32>
    %8 = vector.shape_cast %7 : vector<1x32x1xf32> to vector<32x1xf32>
    %9 = vector.broadcast %8 : vector<32x1xf32> to vector<32x128xf32>
    %10 = arith.addf %6, %9 : vector<32x128xf32>
    %cst_8 = arith.constant 0.000000e+00 : f32
    %11 = vector.broadcast %cst_8 : f32 to vector<32x128xf32>
    %12 = arith.maximumf %10, %11 : vector<32x128xf32>
    %c0_9 = arith.constant 0 : index
    %c0_10 = arith.constant 0 : index
    %c0_11 = arith.constant 0 : index
    %c0_12 = arith.constant 0 : index
    %13 = vector.load %arg4[%c0_9, %c0_10, %c0_11, %c0_12] : memref<3x3x32x32xbf16, #tpu.memory_space<vmem>>, vector<1x1x32x32xbf16>
    %14 = vector.shape_cast %13 : vector<1x1x32x32xbf16> to vector<32x32xbf16>
    %15 = arith.truncf %12 : vector<32x128xf32> to vector<32x128xbf16>
    %cst_13 = arith.constant dense<0.000000e+00> : vector<32x128xf32>
    %16 = tpu.matmul %14, %15, %cst_13 {dimension_numbers = #tpu.dot_dimension_numbers<[1], [0], [0], [1], [0, 0, 1, 1], [], []>} : vector<32x32xbf16>, vector<32x128xbf16>, vector<32x128xf32> -> vector<32x128xf32>
    %c0_14 = arith.constant 0 : index
    %c0_15 = arith.constant 0 : index
    %c0_16 = arith.constant 0 : index
    %c0_17 = arith.constant 0 : index
    %17 = vector.load %arg5[%c0_14, %c0_15, %c0_16, %c0_17] : memref<3x3x32x1xf32, #tpu.memory_space<vmem>>, vector<1x1x32x1xf32>
    %18 = vector.shape_cast %17 : vector<1x1x32x1xf32> to vector<32x1xf32>
    %19 = vector.broadcast %18 : vector<32x1xf32> to vector<32x128xf32>
    %20 = arith.addf %16, %19 : vector<32x128xf32>
    %cst_18 = arith.constant 0.000000e+00 : f32
    %21 = vector.broadcast %cst_18 : f32 to vector<32x128xf32>
    %22 = arith.maximumf %20, %21 : vector<32x128xf32>
    %c0_19 = arith.constant 0 : index
    %c1 = arith.constant 1 : index
    %c0_20 = arith.constant 0 : index
    %c0_21 = arith.constant 0 : index
    %23 = vector.load %arg4[%c0_19, %c1, %c0_20, %c0_21] : memref<3x3x32x32xbf16, #tpu.memory_space<vmem>>, vector<1x1x32x32xbf16>
    %24 = vector.shape_cast %23 : vector<1x1x32x32xbf16> to vector<32x32xbf16>
    %25 = arith.truncf %22 : vector<32x128xf32> to vector<32x128xbf16>
    %cst_22 = arith.constant dense<0.000000e+00> : vector<32x128xf32>
    %26 = tpu.matmul %24, %25, %cst_22 {dimension_numbers = #tpu.dot_dimension_numbers<[1], [0], [0], [1], [0, 0, 1, 1], [], []>} : vector<32x32xbf16>, vector<32x128xbf16>, vector<32x128xf32> -> vector<32x128xf32>
    %c0_23 = arith.constant 0 : index
    %c1_24 = arith.constant 1 : index
    %c0_25 = arith.constant 0 : index
    %c0_26 = arith.constant 0 : index
    %27 = vector.load %arg5[%c0_23, %c1_24, %c0_25, %c0_26] : memref<3x3x32x1xf32, #tpu.memory_space<vmem>>, vector<1x1x32x1xf32>
    %28 = vector.shape_cast %27 : vector<1x1x32x1xf32> to vector<32x1xf32>
    %29 = vector.broadcast %28 : vector<32x1xf32> to vector<32x128xf32>
    %30 = arith.addf %26, %29 : vector<32x128xf32>
    %cst_27 = arith.constant 0.000000e+00 : f32
    %31 = vector.broadcast %cst_27 : f32 to vector<32x128xf32>
    %32 = arith.maximumf %30, %31 : vector<32x128xf32>
    %c0_28 = arith.constant 0 : index
    %c2 = arith.constant 2 : index
    %c0_29 = arith.constant 0 : index
    %c0_30 = arith.constant 0 : index
    %33 = vector.load %arg4[%c0_28, %c2, %c0_29, %c0_30] : memref<3x3x32x32xbf16, #tpu.memory_space<vmem>>, vector<1x1x32x32xbf16>
    %34 = vector.shape_cast %33 : vector<1x1x32x32xbf16> to vector<32x32xbf16>
    %35 = arith.truncf %32 : vector<32x128xf32> to vector<32x128xbf16>
    %cst_31 = arith.constant dense<0.000000e+00> : vector<32x128xf32>
    %36 = tpu.matmul %34, %35, %cst_31 {dimension_numbers = #tpu.dot_dimension_numbers<[1], [0], [0], [1], [0, 0, 1, 1], [], []>} : vector<32x32xbf16>, vector<32x128xbf16>, vector<32x128xf32> -> vector<32x128xf32>
    %c0_32 = arith.constant 0 : index
    %c2_33 = arith.constant 2 : index
    %c0_34 = arith.constant 0 : index
    %c0_35 = arith.constant 0 : index
    %37 = vector.load %arg5[%c0_32, %c2_33, %c0_34, %c0_35] : memref<3x3x32x1xf32, #tpu.memory_space<vmem>>, vector<1x1x32x1xf32>
    %38 = vector.shape_cast %37 : vector<1x1x32x1xf32> to vector<32x1xf32>
    %39 = vector.broadcast %38 : vector<32x1xf32> to vector<32x128xf32>
    %40 = arith.addf %36, %39 : vector<32x128xf32>
    %cst_36 = arith.constant 0.000000e+00 : f32
    %41 = vector.broadcast %cst_36 : f32 to vector<32x128xf32>
    %42 = arith.maximumf %40, %41 : vector<32x128xf32>
    %c0_37 = arith.constant 0 : index
    %c0_38 = arith.constant 0 : index
    %c0_39 = arith.constant 0 : index
    %43 = vector.load %arg6[%c0_37, %c0_38, %c0_39] : memref<3x24x32xbf16, #tpu.memory_space<vmem>>, vector<1x24x32xbf16>
    %44 = vector.shape_cast %43 : vector<1x24x32xbf16> to vector<24x32xbf16>
    %45 = arith.truncf %42 : vector<32x128xf32> to vector<32x128xbf16>
    %cst_40 = arith.constant dense<0.000000e+00> : vector<24x128xf32>
    %46 = tpu.matmul %44, %45, %cst_40 {dimension_numbers = #tpu.dot_dimension_numbers<[1], [0], [0], [1], [0, 0, 1, 1], [], []>} : vector<24x32xbf16>, vector<32x128xbf16>, vector<24x128xf32> -> vector<24x128xf32>
    %c0_41 = arith.constant 0 : index
    %c0_42 = arith.constant 0 : index
    %c0_43 = arith.constant 0 : index
    %47 = vector.load %arg7[%c0_41, %c0_42, %c0_43] : memref<3x24x1xf32, #tpu.memory_space<vmem>>, vector<1x24x1xf32>
    %48 = vector.shape_cast %47 : vector<1x24x1xf32> to vector<24x1xf32>
    %49 = vector.broadcast %48 : vector<24x1xf32> to vector<24x128xf32>
    %50 = arith.addf %46, %49 : vector<24x128xf32>
    %51 = vector.extract_strided_slice %50 {offsets = [0, 0], sizes = [16, 128], strides = [1, 1]} : vector<24x128xf32> to vector<16x128xf32>
    %52 = arith.subf %1, %51 : vector<16x128xf32>
    %53 = vector.extract_strided_slice %50 {offsets = [16, 0], sizes = [1, 128], strides = [1, 1]} : vector<24x128xf32> to vector<1x128xf32>
    %54 = arith.addf %2, %53 : vector<1x128xf32>
    %c1_44 = arith.constant 1 : index
    %c0_45 = arith.constant 0 : index
    %c0_46 = arith.constant 0 : index
    %55 = vector.load %arg2[%c1_44, %c0_45, %c0_46] : memref<3x32x16xbf16, #tpu.memory_space<vmem>>, vector<1x32x16xbf16>
    %56 = vector.shape_cast %55 : vector<1x32x16xbf16> to vector<32x16xbf16>
    %57 = arith.truncf %52 : vector<16x128xf32> to vector<16x128xbf16>
    %cst_47 = arith.constant dense<0.000000e+00> : vector<32x128xf32>
    %58 = tpu.matmul %56, %57, %cst_47 {dimension_numbers = #tpu.dot_dimension_numbers<[1], [0], [0], [1], [0, 0, 1, 1], [], []>} : vector<32x16xbf16>, vector<16x128xbf16>, vector<32x128xf32> -> vector<32x128xf32>
    %c1_48 = arith.constant 1 : index
    %c0_49 = arith.constant 0 : index
    %c0_50 = arith.constant 0 : index
    %59 = vector.load %arg3[%c1_48, %c0_49, %c0_50] : memref<3x32x1xf32, #tpu.memory_space<vmem>>, vector<1x32x1xf32>
    %60 = vector.shape_cast %59 : vector<1x32x1xf32> to vector<32x1xf32>
    %61 = vector.broadcast %60 : vector<32x1xf32> to vector<32x128xf32>
    %62 = arith.addf %58, %61 : vector<32x128xf32>
    %cst_51 = arith.constant 0.000000e+00 : f32
    %63 = vector.broadcast %cst_51 : f32 to vector<32x128xf32>
    %64 = arith.maximumf %62, %63 : vector<32x128xf32>
    %c1_52 = arith.constant 1 : index
    %c0_53 = arith.constant 0 : index
    %c0_54 = arith.constant 0 : index
    %c0_55 = arith.constant 0 : index
    %65 = vector.load %arg4[%c1_52, %c0_53, %c0_54, %c0_55] : memref<3x3x32x32xbf16, #tpu.memory_space<vmem>>, vector<1x1x32x32xbf16>
    %66 = vector.shape_cast %65 : vector<1x1x32x32xbf16> to vector<32x32xbf16>
    %67 = arith.truncf %64 : vector<32x128xf32> to vector<32x128xbf16>
    %cst_56 = arith.constant dense<0.000000e+00> : vector<32x128xf32>
    %68 = tpu.matmul %66, %67, %cst_56 {dimension_numbers = #tpu.dot_dimension_numbers<[1], [0], [0], [1], [0, 0, 1, 1], [], []>} : vector<32x32xbf16>, vector<32x128xbf16>, vector<32x128xf32> -> vector<32x128xf32>
    %c1_57 = arith.constant 1 : index
    %c0_58 = arith.constant 0 : index
    %c0_59 = arith.constant 0 : index
    %c0_60 = arith.constant 0 : index
    %69 = vector.load %arg5[%c1_57, %c0_58, %c0_59, %c0_60] : memref<3x3x32x1xf32, #tpu.memory_space<vmem>>, vector<1x1x32x1xf32>
    %70 = vector.shape_cast %69 : vector<1x1x32x1xf32> to vector<32x1xf32>
    %71 = vector.broadcast %70 : vector<32x1xf32> to vector<32x128xf32>
    %72 = arith.addf %68, %71 : vector<32x128xf32>
    %cst_61 = arith.constant 0.000000e+00 : f32
    %73 = vector.broadcast %cst_61 : f32 to vector<32x128xf32>
    %74 = arith.maximumf %72, %73 : vector<32x128xf32>
    %c1_62 = arith.constant 1 : index
    %c1_63 = arith.constant 1 : index
    %c0_64 = arith.constant 0 : index
    %c0_65 = arith.constant 0 : index
    %75 = vector.load %arg4[%c1_62, %c1_63, %c0_64, %c0_65] : memref<3x3x32x32xbf16, #tpu.memory_space<vmem>>, vector<1x1x32x32xbf16>
    %76 = vector.shape_cast %75 : vector<1x1x32x32xbf16> to vector<32x32xbf16>
    %77 = arith.truncf %74 : vector<32x128xf32> to vector<32x128xbf16>
    %cst_66 = arith.constant dense<0.000000e+00> : vector<32x128xf32>
    %78 = tpu.matmul %76, %77, %cst_66 {dimension_numbers = #tpu.dot_dimension_numbers<[1], [0], [0], [1], [0, 0, 1, 1], [], []>} : vector<32x32xbf16>, vector<32x128xbf16>, vector<32x128xf32> -> vector<32x128xf32>
    %c1_67 = arith.constant 1 : index
    %c1_68 = arith.constant 1 : index
    %c0_69 = arith.constant 0 : index
    %c0_70 = arith.constant 0 : index
    %79 = vector.load %arg5[%c1_67, %c1_68, %c0_69, %c0_70] : memref<3x3x32x1xf32, #tpu.memory_space<vmem>>, vector<1x1x32x1xf32>
    %80 = vector.shape_cast %79 : vector<1x1x32x1xf32> to vector<32x1xf32>
    %81 = vector.broadcast %80 : vector<32x1xf32> to vector<32x128xf32>
    %82 = arith.addf %78, %81 : vector<32x128xf32>
    %cst_71 = arith.constant 0.000000e+00 : f32
    %83 = vector.broadcast %cst_71 : f32 to vector<32x128xf32>
    %84 = arith.maximumf %82, %83 : vector<32x128xf32>
    %c1_72 = arith.constant 1 : index
    %c2_73 = arith.constant 2 : index
    %c0_74 = arith.constant 0 : index
    %c0_75 = arith.constant 0 : index
    %85 = vector.load %arg4[%c1_72, %c2_73, %c0_74, %c0_75] : memref<3x3x32x32xbf16, #tpu.memory_space<vmem>>, vector<1x1x32x32xbf16>
    %86 = vector.shape_cast %85 : vector<1x1x32x32xbf16> to vector<32x32xbf16>
    %87 = arith.truncf %84 : vector<32x128xf32> to vector<32x128xbf16>
    %cst_76 = arith.constant dense<0.000000e+00> : vector<32x128xf32>
    %88 = tpu.matmul %86, %87, %cst_76 {dimension_numbers = #tpu.dot_dimension_numbers<[1], [0], [0], [1], [0, 0, 1, 1], [], []>} : vector<32x32xbf16>, vector<32x128xbf16>, vector<32x128xf32> -> vector<32x128xf32>
    %c1_77 = arith.constant 1 : index
    %c2_78 = arith.constant 2 : index
    %c0_79 = arith.constant 0 : index
    %c0_80 = arith.constant 0 : index
    %89 = vector.load %arg5[%c1_77, %c2_78, %c0_79, %c0_80] : memref<3x3x32x1xf32, #tpu.memory_space<vmem>>, vector<1x1x32x1xf32>
    %90 = vector.shape_cast %89 : vector<1x1x32x1xf32> to vector<32x1xf32>
    %91 = vector.broadcast %90 : vector<32x1xf32> to vector<32x128xf32>
    %92 = arith.addf %88, %91 : vector<32x128xf32>
    %cst_81 = arith.constant 0.000000e+00 : f32
    %93 = vector.broadcast %cst_81 : f32 to vector<32x128xf32>
    %94 = arith.maximumf %92, %93 : vector<32x128xf32>
    %c1_82 = arith.constant 1 : index
    %c0_83 = arith.constant 0 : index
    %c0_84 = arith.constant 0 : index
    %95 = vector.load %arg6[%c1_82, %c0_83, %c0_84] : memref<3x24x32xbf16, #tpu.memory_space<vmem>>, vector<1x24x32xbf16>
    %96 = vector.shape_cast %95 : vector<1x24x32xbf16> to vector<24x32xbf16>
    %97 = arith.truncf %94 : vector<32x128xf32> to vector<32x128xbf16>
    %cst_85 = arith.constant dense<0.000000e+00> : vector<24x128xf32>
    %98 = tpu.matmul %96, %97, %cst_85 {dimension_numbers = #tpu.dot_dimension_numbers<[1], [0], [0], [1], [0, 0, 1, 1], [], []>} : vector<24x32xbf16>, vector<32x128xbf16>, vector<24x128xf32> -> vector<24x128xf32>
    %c1_86 = arith.constant 1 : index
    %c0_87 = arith.constant 0 : index
    %c0_88 = arith.constant 0 : index
    %99 = vector.load %arg7[%c1_86, %c0_87, %c0_88] : memref<3x24x1xf32, #tpu.memory_space<vmem>>, vector<1x24x1xf32>
    %100 = vector.shape_cast %99 : vector<1x24x1xf32> to vector<24x1xf32>
    %101 = vector.broadcast %100 : vector<24x1xf32> to vector<24x128xf32>
    %102 = arith.addf %98, %101 : vector<24x128xf32>
    %103 = vector.extract_strided_slice %102 {offsets = [0, 0], sizes = [16, 128], strides = [1, 1]} : vector<24x128xf32> to vector<16x128xf32>
    %104 = arith.subf %52, %103 : vector<16x128xf32>
    %105 = vector.extract_strided_slice %102 {offsets = [16, 0], sizes = [1, 128], strides = [1, 1]} : vector<24x128xf32> to vector<1x128xf32>
    %106 = arith.addf %54, %105 : vector<1x128xf32>
    %c2_89 = arith.constant 2 : index
    %c0_90 = arith.constant 0 : index
    %c0_91 = arith.constant 0 : index
    %107 = vector.load %arg2[%c2_89, %c0_90, %c0_91] : memref<3x32x16xbf16, #tpu.memory_space<vmem>>, vector<1x32x16xbf16>
    %108 = vector.shape_cast %107 : vector<1x32x16xbf16> to vector<32x16xbf16>
    %109 = arith.truncf %104 : vector<16x128xf32> to vector<16x128xbf16>
    %cst_92 = arith.constant dense<0.000000e+00> : vector<32x128xf32>
    %110 = tpu.matmul %108, %109, %cst_92 {dimension_numbers = #tpu.dot_dimension_numbers<[1], [0], [0], [1], [0, 0, 1, 1], [], []>} : vector<32x16xbf16>, vector<16x128xbf16>, vector<32x128xf32> -> vector<32x128xf32>
    %c2_93 = arith.constant 2 : index
    %c0_94 = arith.constant 0 : index
    %c0_95 = arith.constant 0 : index
    %111 = vector.load %arg3[%c2_93, %c0_94, %c0_95] : memref<3x32x1xf32, #tpu.memory_space<vmem>>, vector<1x32x1xf32>
    %112 = vector.shape_cast %111 : vector<1x32x1xf32> to vector<32x1xf32>
    %113 = vector.broadcast %112 : vector<32x1xf32> to vector<32x128xf32>
    %114 = arith.addf %110, %113 : vector<32x128xf32>
    %cst_96 = arith.constant 0.000000e+00 : f32
    %115 = vector.broadcast %cst_96 : f32 to vector<32x128xf32>
    %116 = arith.maximumf %114, %115 : vector<32x128xf32>
    %c2_97 = arith.constant 2 : index
    %c0_98 = arith.constant 0 : index
    %c0_99 = arith.constant 0 : index
    %c0_100 = arith.constant 0 : index
    %117 = vector.load %arg4[%c2_97, %c0_98, %c0_99, %c0_100] : memref<3x3x32x32xbf16, #tpu.memory_space<vmem>>, vector<1x1x32x32xbf16>
    %118 = vector.shape_cast %117 : vector<1x1x32x32xbf16> to vector<32x32xbf16>
    %119 = arith.truncf %116 : vector<32x128xf32> to vector<32x128xbf16>
    %cst_101 = arith.constant dense<0.000000e+00> : vector<32x128xf32>
    %120 = tpu.matmul %118, %119, %cst_101 {dimension_numbers = #tpu.dot_dimension_numbers<[1], [0], [0], [1], [0, 0, 1, 1], [], []>} : vector<32x32xbf16>, vector<32x128xbf16>, vector<32x128xf32> -> vector<32x128xf32>
    %c2_102 = arith.constant 2 : index
    %c0_103 = arith.constant 0 : index
    %c0_104 = arith.constant 0 : index
    %c0_105 = arith.constant 0 : index
    %121 = vector.load %arg5[%c2_102, %c0_103, %c0_104, %c0_105] : memref<3x3x32x1xf32, #tpu.memory_space<vmem>>, vector<1x1x32x1xf32>
    %122 = vector.shape_cast %121 : vector<1x1x32x1xf32> to vector<32x1xf32>
    %123 = vector.broadcast %122 : vector<32x1xf32> to vector<32x128xf32>
    %124 = arith.addf %120, %123 : vector<32x128xf32>
    %cst_106 = arith.constant 0.000000e+00 : f32
    %125 = vector.broadcast %cst_106 : f32 to vector<32x128xf32>
    %126 = arith.maximumf %124, %125 : vector<32x128xf32>
    %c2_107 = arith.constant 2 : index
    %c1_108 = arith.constant 1 : index
    %c0_109 = arith.constant 0 : index
    %c0_110 = arith.constant 0 : index
    %127 = vector.load %arg4[%c2_107, %c1_108, %c0_109, %c0_110] : memref<3x3x32x32xbf16, #tpu.memory_space<vmem>>, vector<1x1x32x32xbf16>
    %128 = vector.shape_cast %127 : vector<1x1x32x32xbf16> to vector<32x32xbf16>
    %129 = arith.truncf %126 : vector<32x128xf32> to vector<32x128xbf16>
    %cst_111 = arith.constant dense<0.000000e+00> : vector<32x128xf32>
    %130 = tpu.matmul %128, %129, %cst_111 {dimension_numbers = #tpu.dot_dimension_numbers<[1], [0], [0], [1], [0, 0, 1, 1], [], []>} : vector<32x32xbf16>, vector<32x128xbf16>, vector<32x128xf32> -> vector<32x128xf32>
    %c2_112 = arith.constant 2 : index
    %c1_113 = arith.constant 1 : index
    %c0_114 = arith.constant 0 : index
    %c0_115 = arith.constant 0 : index
    %131 = vector.load %arg5[%c2_112, %c1_113, %c0_114, %c0_115] : memref<3x3x32x1xf32, #tpu.memory_space<vmem>>, vector<1x1x32x1xf32>
    %132 = vector.shape_cast %131 : vector<1x1x32x1xf32> to vector<32x1xf32>
    %133 = vector.broadcast %132 : vector<32x1xf32> to vector<32x128xf32>
    %134 = arith.addf %130, %133 : vector<32x128xf32>
    %cst_116 = arith.constant 0.000000e+00 : f32
    %135 = vector.broadcast %cst_116 : f32 to vector<32x128xf32>
    %136 = arith.maximumf %134, %135 : vector<32x128xf32>
    %c2_117 = arith.constant 2 : index
    %c2_118 = arith.constant 2 : index
    %c0_119 = arith.constant 0 : index
    %c0_120 = arith.constant 0 : index
    %137 = vector.load %arg4[%c2_117, %c2_118, %c0_119, %c0_120] : memref<3x3x32x32xbf16, #tpu.memory_space<vmem>>, vector<1x1x32x32xbf16>
    %138 = vector.shape_cast %137 : vector<1x1x32x32xbf16> to vector<32x32xbf16>
    %139 = arith.truncf %136 : vector<32x128xf32> to vector<32x128xbf16>
    %cst_121 = arith.constant dense<0.000000e+00> : vector<32x128xf32>
    %140 = tpu.matmul %138, %139, %cst_121 {dimension_numbers = #tpu.dot_dimension_numbers<[1], [0], [0], [1], [0, 0, 1, 1], [], []>} : vector<32x32xbf16>, vector<32x128xbf16>, vector<32x128xf32> -> vector<32x128xf32>
    %c2_122 = arith.constant 2 : index
    %c2_123 = arith.constant 2 : index
    %c0_124 = arith.constant 0 : index
    %c0_125 = arith.constant 0 : index
    %141 = vector.load %arg5[%c2_122, %c2_123, %c0_124, %c0_125] : memref<3x3x32x1xf32, #tpu.memory_space<vmem>>, vector<1x1x32x1xf32>
    %142 = vector.shape_cast %141 : vector<1x1x32x1xf32> to vector<32x1xf32>
    %143 = vector.broadcast %142 : vector<32x1xf32> to vector<32x128xf32>
    %144 = arith.addf %140, %143 : vector<32x128xf32>
    %cst_126 = arith.constant 0.000000e+00 : f32
    %145 = vector.broadcast %cst_126 : f32 to vector<32x128xf32>
    %146 = arith.maximumf %144, %145 : vector<32x128xf32>
    %c2_127 = arith.constant 2 : index
    %c0_128 = arith.constant 0 : index
    %c0_129 = arith.constant 0 : index
    %147 = vector.load %arg6[%c2_127, %c0_128, %c0_129] : memref<3x24x32xbf16, #tpu.memory_space<vmem>>, vector<1x24x32xbf16>
    %148 = vector.shape_cast %147 : vector<1x24x32xbf16> to vector<24x32xbf16>
    %149 = arith.truncf %146 : vector<32x128xf32> to vector<32x128xbf16>
    %cst_130 = arith.constant dense<0.000000e+00> : vector<24x128xf32>
    %150 = tpu.matmul %148, %149, %cst_130 {dimension_numbers = #tpu.dot_dimension_numbers<[1], [0], [0], [1], [0, 0, 1, 1], [], []>} : vector<24x32xbf16>, vector<32x128xbf16>, vector<24x128xf32> -> vector<24x128xf32>
    %c2_131 = arith.constant 2 : index
    %c0_132 = arith.constant 0 : index
    %c0_133 = arith.constant 0 : index
    %151 = vector.load %arg7[%c2_131, %c0_132, %c0_133] : memref<3x24x1xf32, #tpu.memory_space<vmem>>, vector<1x24x1xf32>
    %152 = vector.shape_cast %151 : vector<1x24x1xf32> to vector<24x1xf32>
    %153 = vector.broadcast %152 : vector<24x1xf32> to vector<24x128xf32>
    %154 = arith.addf %150, %153 : vector<24x128xf32>
    %155 = vector.extract_strided_slice %154 {offsets = [16, 0], sizes = [1, 128], strides = [1, 1]} : vector<24x128xf32> to vector<1x128xf32>
    %156 = arith.addf %106, %155 : vector<1x128xf32>
    %c0_134 = arith.constant 0 : index
    %c0_135 = arith.constant 0 : index
    %157 = vector.load %arg8[%c0_134, %c0_135] : memref<1x128xf32, #tpu.memory_space<vmem>>, vector<1x128xf32>
    tpu.vector_store %arg8[%c0_134, %c0_135], %156 {strides = array<i32>} : memref<1x128xf32, #tpu.memory_space<vmem>>, vector<1x128xf32>,
    return
  }
  func.func @transform_0(%arg0: i32) -> (i32, i32) {
    %c0_i32 = arith.constant 0 : i32
    %c0_i32_0 = arith.constant 0 : i32
    return %arg0, %c0_i32 : i32, i32
  }
  func.func @transform_1(%arg0: i32) -> (i32, i32, i32) {
    %c0_i32 = arith.constant 0 : i32
    %c0_i32_0 = arith.constant 0 : i32
    %c0_i32_1 = arith.constant 0 : i32
    %c0_i32_2 = arith.constant 0 : i32
    return %c0_i32, %c0_i32_0, %c0_i32_1 : i32, i32, i32
  }
  func.func @transform_2(%arg0: i32) -> (i32, i32, i32) {
    %c0_i32 = arith.constant 0 : i32
    %c0_i32_0 = arith.constant 0 : i32
    %c0_i32_1 = arith.constant 0 : i32
    %c0_i32_2 = arith.constant 0 : i32
    return %c0_i32, %c0_i32_0, %c0_i32_1 : i32, i32, i32
  }
  func.func @transform_3(%arg0: i32) -> (i32, i32, i32, i32) {
    %c0_i32 = arith.constant 0 : i32
    %c0_i32_0 = arith.constant 0 : i32
    %c0_i32_1 = arith.constant 0 : i32
    %c0_i32_2 = arith.constant 0 : i32
    %c0_i32_3 = arith.constant 0 : i32
    return %c0_i32, %c0_i32_0, %c0_i32_1, %c0_i32_2 : i32, i32, i32, i32
  }
  func.func @transform_4(%arg0: i32) -> (i32, i32, i32, i32) {
    %c0_i32 = arith.constant 0 : i32
    %c0_i32_0 = arith.constant 0 : i32
    %c0_i32_1 = arith.constant 0 : i32
    %c0_i32_2 = arith.constant 0 : i32
    %c0_i32_3 = arith.constant 0 : i32
    return %c0_i32, %c0_i32_0, %c0_i32_1, %c0_i32_2 : i32, i32, i32, i32
  }
  func.func @transform_5(%arg0: i32) -> (i32, i32, i32) {
    %c0_i32 = arith.constant 0 : i32
    %c0_i32_0 = arith.constant 0 : i32
    %c0_i32_1 = arith.constant 0 : i32
    %c0_i32_2 = arith.constant 0 : i32
    return %c0_i32, %c0_i32_0, %c0_i32_1 : i32, i32, i32
  }
  func.func @transform_6(%arg0: i32) -> (i32, i32, i32) {
    %c0_i32 = arith.constant 0 : i32
    %c0_i32_0 = arith.constant 0 : i32
    %c0_i32_1 = arith.constant 0 : i32
    %c0_i32_2 = arith.constant 0 : i32
    return %c0_i32, %c0_i32_0, %c0_i32_1 : i32, i32, i32
  }
  func.func @transform_7(%arg0: i32) -> (i32, i32) {
    %c0_i32 = arith.constant 0 : i32
    %c0_i32_0 = arith.constant 0 : i32
    return %c0_i32, %arg0 : i32, i32
  }
}

</mosaic_0001>

<llo_original>
// kernel: tpu_custom_call.1
$region0: #{tpu_custom_call.1}
  #allocation0 [shape = 'u32[]', space=smem, size = 0x4, offset = 0x4, fixed_abs, tag = 'smem constant byte address 0x4 - core index']
  #allocation1 [shape = 'u32[144,128]{1,0:T(1,128)}', space=vmem, size = 0x12000, scoped, tag = 'internal scratch']
  %s0 = inlined_call_operand.vmem [shape: f32[128,16], index: 0, kind: input, shape index: {}]
  %s1 = inlined_call_operand.vmem [shape: bf16[3,32,16], index: 1, kind: input, shape index: {}]
  %s2 = inlined_call_operand.vmem [shape: f32[3,32,1], index: 2, kind: input, shape index: {}]
  %s3 = inlined_call_operand.vmem [shape: bf16[3,3,32,32], index: 3, kind: input, shape index: {}]
  %s4 = inlined_call_operand.vmem [shape: f32[3,3,32,1], index: 4, kind: input, shape index: {}]
  %s5 = inlined_call_operand.vmem [shape: bf16[3,24,32], index: 5, kind: input, shape index: {}]
  %s6 = inlined_call_operand.vmem [shape: f32[3,24,1], index: 6, kind: input, shape index: {}]
  %s7 = inlined_call_operand.hbm [shape: f32[1,128], index: 7, kind: output, shape index: {}]
  %s8 = sld [smem:[#allocation0]]
  $region38: #{tpu_custom_call.1} parent=0
    _
  %s10 = ssub.s32 1, %s8
  %s11 = scalar_select 0, %s10, %s8
  $region1: #{tpu_custom_call.1} parent=0
    #allocation2 [shape = 'u8[512]{0}', space=vmem, size = 0x400, scoped, tag = 'output window, operand 0, single buffered']
    #allocation3 [shape = 's32[1]{0}', space=sflag, size = 0x4, scoped, tag = 'scoped memory for tpu_custom_call.1']
    %12 = vsyncpa [#allocation3], 0
    // Predicated region
    $region2: #{tpu_custom_call.1} parent=1 // pred_check
      _
    $region3: #{tpu_custom_call.1} parent=1 // pred_check_branch
      %14 = sbr.rel (0) target = $region5
    $region4: #{tpu_custom_call.1} parent=1 // pred_region
      _
    $region5: #{tpu_custom_call.1} parent=1 // pred_fallthru
      _
    // Predicated region
    $region6: #{tpu_custom_call.1} parent=1 // pred_check
      _
    $region7: #{tpu_custom_call.1} parent=1 // pred_check_branch
      %16 = sbr.rel (0) target = $region9
    $region8: #{tpu_custom_call.1} parent=1 // pred_region
      _
    $region9: #{tpu_custom_call.1} parent=1 // pred_fallthru
      _
    // Predicated region
    $region10: #{tpu_custom_call.1} parent=1 // pred_check
      _
    $region11: #{tpu_custom_call.1} parent=1 // pred_check_branch
      %18 = sbr.rel (0) target = $region13
    $region12: #{tpu_custom_call.1} parent=1 // pred_region
      _
    $region13: #{tpu_custom_call.1} parent=1 // pred_fallthru
      _
    // Predicated region
    $region14: #{tpu_custom_call.1} parent=1 // pred_check
      _
    $region15: #{tpu_custom_call.1} parent=1 // pred_check_branch
      %20 = sbr.rel (0) target = $region17
    $region16: #{tpu_custom_call.1} parent=1 // pred_region
      _
    $region17: #{tpu_custom_call.1} parent=1 // pred_fallthru
      _
    // Predicated region
    $region18: #{tpu_custom_call.1} parent=1 // pred_check
      _
    $region19: #{tpu_custom_call.1} parent=1 // pred_check_branch
      %22 = sbr.rel (0) target = $region21
    $region20: #{tpu_custom_call.1} parent=1 // pred_region
      _
    $region21: #{tpu_custom_call.1} parent=1 // pred_fallthru
      _
    // Predicated region
    $region22: #{tpu_custom_call.1} parent=1 // pred_check
      _
    $region23: #{tpu_custom_call.1} parent=1 // pred_check_branch
      %24 = sbr.rel (0) target = $region25
    $region24: #{tpu_custom_call.1} parent=1 // pred_region
      _
    $region25: #{tpu_custom_call.1} parent=1 // pred_fallthru
      _
    // Predicated region
    $region26: #{tpu_custom_call.1} parent=1 // pred_check
      _
    $region27: #{tpu_custom_call.1} parent=1 // pred_check_branch
      %26 = sbr.rel (0) target = $region29
    $region28: #{tpu_custom_call.1} parent=1 // pred_region
      _
    $region29: #{tpu_custom_call.1} parent=1 // pred_fallthru
      _
    %v28 = vld [vmem:[%s0] sm:$0xff]
    %v29 = vld [vmem:[%s0 + $0x8] sm:$0xff]
    %v30 = vld [vmem:[%s0 + $0x10] sm:$0xff]
    %v31 = vld [vmem:[%s0 + $0x18] sm:$0xff]
    %v32 = vld [vmem:[%s0 + $0x20] sm:$0xff]
    %v33 = vld [vmem:[%s0 + $0x28] sm:$0xff]
    %v34 = vld [vmem:[%s0 + $0x30] sm:$0xff]
    %v35 = vld [vmem:[%s0 + $0x38] sm:$0xff]
    %v36 = vld [vmem:[%s0 + $0x40] sm:$0xff]
    %v37 = vld [vmem:[%s0 + $0x48] sm:$0xff]
    %v38 = vld [vmem:[%s0 + $0x50] sm:$0xff]
    %v39 = vld [vmem:[%s0 + $0x58] sm:$0xff]
    %v40 = vld [vmem:[%s0 + $0x60] sm:$0xff]
    %v41 = vld [vmem:[%s0 + $0x68] sm:$0xff]
    %v42 = vld [vmem:[%s0 + $0x70] sm:$0xff]
    %v43 = vld [vmem:[%s0 + $0x78] sm:$0xff]
    %44 = vxpose.xlu0.b32.start [1/16] %v28, 128
    %45 = vxpose.xlu0.b32.cont [2/16] %v29, 128
    %46 = vxpose.xlu0.b32.cont [3/16] %v30, 128
    %47 = vxpose.xlu0.b32.cont [4/16] %v31, 128
    %48 = vxpose.xlu0.b32.cont [5/16] %v32, 128
    %49 = vxpose.xlu0.b32.cont [6/16] %v33, 128
    %50 = vxpose.xlu0.b32.cont [7/16] %v34, 128
    %51 = vxpose.xlu0.b32.cont [8/16] %v35, 128
    %52 = vxpose.xlu0.b32.cont [9/16] %v36, 128
    %53 = vxpose.xlu0.b32.cont [10/16] %v37, 128
    %54 = vxpose.xlu0.b32.cont [11/16] %v38, 128
    %55 = vxpose.xlu0.b32.cont [12/16] %v39, 128
    %56 = vxpose.xlu0.b32.cont [13/16] %v40, 128
    %57 = vxpose.xlu0.b32.cont [14/16] %v41, 128
    %58 = vxpose.xlu0.b32.cont [15/16] %v42, 128
    %59 = vxpose.xlu0.b32.end [16/16] %v43, 128
    %v60 = vpop.trf.xlu0
    %v61 = vpop.trf.xlu0
    %v62 = vpop.trf.xlu0
    %v63 = vpop.trf.xlu0
    %v64 = vpop.trf.xlu0
    %v65 = vpop.trf.xlu0
    %v66 = vpop.trf.xlu0
    %v67 = vpop.trf.xlu0
    %v68 = vpop.trf.xlu0
    %v69 = vpop.trf.xlu0
    %v70 = vpop.trf.xlu0
    %v71 = vpop.trf.xlu0
    %v72 = vpop.trf.xlu0
    %v73 = vpop.trf.xlu0
    %v74 = vpop.trf.xlu0
    %v75 = vpop.trf.xlu0
    %v76 = vld [vmem:[%s1] sm:$0xf]
    %v77 = vld [vmem:[%s1 + $0x4] sm:$0xf]
    %v78 = vld [vmem:[%s1 + $0x8] sm:$0xf]
    %v79 = vld [vmem:[%s1 + $0xc] sm:$0xf]
    %v80 = vpack.c.bf16 %v61, %v60
    %v81 = vld [vmem:[%s2] sm:$0xff]
    %v82 = vld [vmem:[%s2 + $0x8] sm:$0xff]
    %v83 = vld [vmem:[%s2 + $0x10] sm:$0xff]
    %v84 = vld [vmem:[%s2 + $0x18] sm:$0xff]
    %86 = vset.pattern.permute.xlu0 0
    %87 = vperm.xlu0 %86, %v81
    %v88 = vpop.permute.xlu0 %87
    %91 = vset.pattern.permute.xlu0 0
    %92 = vperm.xlu0 %91, %v82
    %v93 = vpop.permute.xlu0 %92
    %96 = vset.pattern.permute.xlu0 0
    %97 = vperm.xlu0 %96, %v83
    %v98 = vpop.permute.xlu0 %97
    %101 = vset.pattern.permute.xlu0 0
    %102 = vperm.xlu0 %101, %v84
    %v103 = vpop.permute.xlu0 %102
    %v109 = vunpack.c.l.b16 %v76
    %v110 = vunpack.c.l.b16 %v77
    %v111 = vunpack.c.l.b16 %v78
    %v112 = vunpack.c.l.b16 %v79
    %v113 = vpack.c.b16 %v110, %v109
    %v114 = vpack.c.b16 %v112, %v111
    %vm115 = vcmask 130048
    %v117 = vsel %vm115, %v113, 0
    %v120 = vsel %vm115, %v114, 0
    %122 = vmatprep.subr.bf16.mxu0 0
    %123 = vmatpush1.bf16.msra.mxu0 0
    %124 = vmatprep.subr.bf16.mxu0 0
    %125 = vmatpush1.bf16.msra.mxu0 0
    %126 = vmatprep.subr.bf16.mxu0 0
    %127 = vmatpush1.bf16.msra.mxu0 0
    %128 = vmatprep.subr.bf16.mxu0 0
    %129 = vmatpush1.bf16.msra.mxu0 0
    %130 = vmatprep.subr.bf16.mxu0 0
    %131 = vmatpush1.bf16.msra.mxu0 0
    %132 = vmatprep.subr.bf16.mxu0 0
    %133 = vmatpush1.bf16.msra.mxu0 0
    %134 = vmatprep.subr.bf16.mxu0 0
    %135 = vmatpush1.bf16.msra.mxu0 0
    %136 = vmatprep.subr.bf16.mxu0 0
    %137 = vmatpush1.bf16.msra.mxu0 %v80
    %138 = vmatprep.subr.bf16.mxu0 0
    %139 = vmatpush2.bf16.msra.mxu0 0
    %140 = vmatprep.subr.bf16.mxu0 0
    %141 = vmatpush2.bf16.msra.mxu0 0
    %142 = vmatprep.subr.bf16.mxu0 0
    %143 = vmatpush2.bf16.msra.mxu0 0
    %144 = vmatprep.subr.bf16.mxu0 0
    %145 = vmatpush2.bf16.msra.mxu0 0
    %146 = vmatprep.subr.bf16.mxu0 0
    %147 = vmatpush2.bf16.msra.mxu0 0
    %148 = vmatprep.subr.bf16.mxu0 0
    %149 = vmatpush2.bf16.msra.mxu0 0
    %150 = vmatprep.subr.bf16.mxu0 0
    %151 = vmatpush2.bf16.msra.mxu0 0
    %152 = vmatprep.subr.bf16.mxu0 0
    %153 = vmatpush2.bf16.msra.mxu0 0
    %154 = vmatprep.mubr.bf16.mxu0 0
    %155 = vmatmul.mubr.bf16.gmra.mxu0 %v117
    %v156 = vpop.f32.mrf.mxu0
    %v157 = vadd.f32 %v88, %v156
    %v158 = vpop.f32.mrf.mxu0
    %v159 = vpop.f32.mrf.mxu0
    %v160 = vadd.f32 %v93, %v159
    %v161 = vpop.f32.mrf.mxu0
    %162 = vmatprep.mubr.bf16.mxu0 0
    %163 = vmatmul.mubr.bf16.gmra.mxu0 %v120
    %v164 = vpop.f32.mrf.mxu0
    %v165 = vadd.f32 %v98, %v164
    %v166 = vpop.f32.mrf.mxu0
    %v167 = vpop.f32.mrf.mxu0
    %v168 = vadd.f32 %v103, %v167
    %v169 = vpop.f32.mrf.mxu0
    %170 = vdwg.mxu0
    %v171 = vmax.f32 %v157, 0.0
    %v172 = vmax.f32 %v160, 0.0
    %v173 = vmax.f32 %v165, 0.0
    %v174 = vmax.f32 %v168, 0.0
    %v175 = vld [vmem:[%s3] sm:$0xf]
    %v176 = vld [vmem:[%s3 + $0x4] sm:$0xf]
    %v177 = vld [vmem:[%s3 + $0x8] sm:$0xf]
    %v178 = vld [vmem:[%s3 + $0xc] sm:$0xf]
    %v179 = vpack.c.bf16 %v172, %v171
    %v180 = vpack.c.bf16 %v174, %v173
    %v181 = vld [vmem:[%s4] sm:$0xff]
    %v182 = vld [vmem:[%s4 + $0x8] sm:$0xff]
    %v183 = vld [vmem:[%s4 + $0x10] sm:$0xff]
    %v184 = vld [vmem:[%s4 + $0x18] sm:$0xff]
    %186 = vset.pattern.permute.xlu0 0
    %187 = vperm.xlu0 %186, %v181
    %v188 = vpop.permute.xlu0 %187
    %191 = vset.pattern.permute.xlu0 0
    %192 = vperm.xlu0 %191, %v182
    %v193 = vpop.permute.xlu0 %192
    %196 = vset.pattern.permute.xlu0 0
    %197 = vperm.xlu0 %196, %v183
    %v198 = vpop.permute.xlu0 %197
    %201 = vset.pattern.permute.xlu0 0
    %202 = vperm.xlu0 %201, %v184
    %v203 = vpop.permute.xlu0 %202
    %v209 = vunpack.c.l.b16 %v175
    %v210 = vunpack.c.l.b16 %v176
    %v211 = vunpack.c.l.b16 %v177
    %v212 = vunpack.c.l.b16 %v178
    %v213 = vpack.c.b16 %v210, %v209
    %v214 = vpack.c.b16 %v212, %v211
    %vm215 = vcmask 261120
    %v217 = vsel %vm215, %v213, 0
    %v220 = vsel %vm215, %v214, 0
    %222 = vmatprep.subr.bf16.mxu0 0
    %223 = vmatpush1.bf16.msra.mxu0 0
    %224 = vmatprep.subr.bf16.mxu0 0
    %225 = vmatpush1.bf16.msra.mxu0 0
    %226 = vmatprep.subr.bf16.mxu0 0
    %227 = vmatpush1.bf16.msra.mxu0 0
    %228 = vmatprep.subr.bf16.mxu0 0
    %229 = vmatpush1.bf16.msra.mxu0 0
    %230 = vmatprep.subr.bf16.mxu0 0
    %231 = vmatpush1.bf16.msra.mxu0 0
    %232 = vmatprep.subr.bf16.mxu0 0
    %233 = vmatpush1.bf16.msra.mxu0 0
    %234 = vmatprep.subr.bf16.mxu0 0
    %235 = vmatpush1.bf16.msra.mxu0 %v180
    %236 = vmatprep.subr.bf16.mxu0 0
    %237 = vmatpush1.bf16.msra.mxu0 %v179
    %238 = vmatprep.subr.bf16.mxu0 0
    %239 = vmatpush2.bf16.msra.mxu0 0
    %240 = vmatprep.subr.bf16.mxu0 0
    %241 = vmatpush2.bf16.msra.mxu0 0
    %242 = vmatprep.subr.bf16.mxu0 0
    %243 = vmatpush2.bf16.msra.mxu0 0
    %244 = vmatprep.subr.bf16.mxu0 0
    %245 = vmatpush2.bf16.msra.mxu0 0
    %246 = vmatprep.subr.bf16.mxu0 0
    %247 = vmatpush2.bf16.msra.mxu0 0
    %248 = vmatprep.subr.bf16.mxu0 0
    %249 = vmatpush2.bf16.msra.mxu0 0
    %250 = vmatprep.subr.bf16.mxu0 0
    %251 = vmatpush2.bf16.msra.mxu0 0
    %252 = vmatprep.subr.bf16.mxu0 0
    %253 = vmatpush2.bf16.msra.mxu0 0
    %254 = vmatprep.mubr.bf16.mxu0 0
    %255 = vmatmul.mubr.bf16.gmra.mxu0 %v217
    %v256 = vpop.f32.mrf.mxu0
    %v257 = vadd.f32 %v188, %v256
    %v258 = vpop.f32.mrf.mxu0
    %v259 = vpop.f32.mrf.mxu0
    %v260 = vadd.f32 %v193, %v259
    %v261 = vpop.f32.mrf.mxu0
    %262 = vmatprep.mubr.bf16.mxu0 0
    %263 = vmatmul.mubr.bf16.gmra.mxu0 %v220
    %v264 = vpop.f32.mrf.mxu0
    %v265 = vadd.f32 %v198, %v264
    %v266 = vpop.f32.mrf.mxu0
    %v267 = vpop.f32.mrf.mxu0
    %v268 = vadd.f32 %v203, %v267
    %v269 = vpop.f32.mrf.mxu0
    %270 = vdwg.mxu0
    %v271 = vmax.f32 %v257, 0.0
    %v272 = vmax.f32 %v260, 0.0
    %v273 = vmax.f32 %v265, 0.0
    %v274 = vmax.f32 %v268, 0.0
    %s275 = scalar_lea.vmem %s3, 16
    %v276 = vld [vmem:[%s275] sm:$0xf]
    %v277 = vld [vmem:[%s275 + $0x4] sm:$0xf]
    %v278 = vld [vmem:[%s275 + $0x8] sm:$0xf]
    %v279 = vld [vmem:[%s275 + $0xc] sm:$0xf]
    %v280 = vpack.c.bf16 %v272, %v271
    %v281 = vpack.c.bf16 %v274, %v273
    %s282 = scalar_lea.vmem %s4, 32
    %v283 = vld [vmem:[%s282] sm:$0xff]
    %v284 = vld [vmem:[%s282 + $0x8] sm:$0xff]
    %v285 = vld [vmem:[%s282 + $0x10] sm:$0xff]
    %v286 = vld [vmem:[%s282 + $0x18] sm:$0xff]
    %288 = vset.pattern.permute.xlu0 0
    %289 = vperm.xlu0 %288, %v283
    %v290 = vpop.permute.xlu0 %289
    %293 = vset.pattern.permute.xlu0 0
    %294 = vperm.xlu0 %293, %v284
    %v295 = vpop.permute.xlu0 %294
    %298 = vset.pattern.permute.xlu0 0
    %299 = vperm.xlu0 %298, %v285
    %v300 = vpop.permute.xlu0 %299
    %303 = vset.pattern.permute.xlu0 0
    %304 = vperm.xlu0 %303, %v286
    %v305 = vpop.permute.xlu0 %304
    %v311 = vunpack.c.l.b16 %v276
    %v312 = vunpack.c.l.b16 %v277
    %v313 = vunpack.c.l.b16 %v278
    %v314 = vunpack.c.l.b16 %v279
    %v315 = vpack.c.b16 %v312, %v311
    %v316 = vpack.c.b16 %v314, %v313
    %v318 = vsel %vm215, %v315, 0
    %v321 = vsel %vm215, %v316, 0
    %323 = vmatprep.subr.bf16.mxu0 0
    %324 = vmatpush1.bf16.msra.mxu0 0
    %325 = vmatprep.subr.bf16.mxu0 0
    %326 = vmatpush1.bf16.msra.mxu0 0
    %327 = vmatprep.subr.bf16.mxu0 0
    %328 = vmatpush1.bf16.msra.mxu0 0
    %329 = vmatprep.subr.bf16.mxu0 0
    %330 = vmatpush1.bf16.msra.mxu0 0
    %331 = vmatprep.subr.bf16.mxu0 0
    %332 = vmatpush1.bf16.msra.mxu0 0
    %333 = vmatprep.subr.bf16.mxu0 0
    %334 = vmatpush1.bf16.msra.mxu0 0
    %335 = vmatprep.subr.bf16.mxu0 0
    %336 = vmatpush1.bf16.msra.mxu0 %v281
    %337 = vmatprep.subr.bf16.mxu0 0
    %338 = vmatpush1.bf16.msra.mxu0 %v280
    %339 = vmatprep.subr.bf16.mxu0 0
    %340 = vmatpush2.bf16.msra.mxu0 0
    %341 = vmatprep.subr.bf16.mxu0 0
    %342 = vmatpush2.bf16.msra.mxu0 0
    %343 = vmatprep.subr.bf16.mxu0 0
    %344 = vmatpush2.bf16.msra.mxu0 0
    %345 = vmatprep.subr.bf16.mxu0 0
    %346 = vmatpush2.bf16.msra.mxu0 0
    %347 = vmatprep.subr.bf16.mxu0 0
    %348 = vmatpush2.bf16.msra.mxu0 0
    %349 = vmatprep.subr.bf16.mxu0 0
    %350 = vmatpush2.bf16.msra.mxu0 0
    %351 = vmatprep.subr.bf16.mxu0 0
    %352 = vmatpush2.bf16.msra.mxu0 0
    %353 = vmatprep.subr.bf16.mxu0 0
    %354 = vmatpush2.bf16.msra.mxu0 0
    %355 = vmatprep.mubr.bf16.mxu0 0
    %356 = vmatmul.mubr.bf16.gmra.mxu0 %v318
    %v357 = vpop.f32.mrf.mxu0
    %v358 = vadd.f32 %v290, %v357
    %v359 = vpop.f32.mrf.mxu0
    %v360 = vpop.f32.mrf.mxu0
    %v361 = vadd.f32 %v295, %v360
    %v362 = vpop.f32.mrf.mxu0
    %363 = vmatprep.mubr.bf16.mxu0 0
    %364 = vmatmul.mubr.bf16.gmra.mxu0 %v321
    %v365 = vpop.f32.mrf.mxu0
    %v366 = vadd.f32 %v300, %v365
    %v367 = vpop.f32.mrf.mxu0
    %v368 = vpop.f32.mrf.mxu0
    %v369 = vadd.f32 %v305, %v368
    %v370 = vpop.f32.mrf.mxu0
    %371 = vdwg.mxu0
    %v372 = vmax.f32 %v358, 0.0
    %v373 = vmax.f32 %v361, 0.0
    %v374 = vmax.f32 %v366, 0.0
    %v375 = vmax.f32 %v369, 0.0
    %s376 = scalar_lea.vmem %s3, 32
    %v377 = vld [vmem:[%s376] sm:$0xf]
    %v378 = vld [vmem:[%s376 + $0x4] sm:$0xf]
    %v379 = vld [vmem:[%s376 + $0x8] sm:$0xf]
    %v380 = vld [vmem:[%s376 + $0xc] sm:$0xf]
    %v381 = vpack.c.bf16 %v373, %v372
    %v382 = vpack.c.bf16 %v375, %v374
    %s383 = scalar_lea.vmem %s4, 64
    %v384 = vld [vmem:[%s383] sm:$0xff]
    %v385 = vld [vmem:[%s383 + $0x8] sm:$0xff]
    %v386 = vld [vmem:[%s383 + $0x10] sm:$0xff]
    %v387 = vld [vmem:[%s383 + $0x18] sm:$0xff]
    %389 = vset.pattern.permute.xlu0 0
    %390 = vperm.xlu0 %389, %v384
    %v391 = vpop.permute.xlu0 %390
    %394 = vset.pattern.permute.xlu0 0
    %395 = vperm.xlu0 %394, %v385
    %v396 = vpop.permute.xlu0 %395
    %399 = vset.pattern.permute.xlu0 0
    %400 = vperm.xlu0 %399, %v386
    %v401 = vpop.permute.xlu0 %400
    %404 = vset.pattern.permute.xlu0 0
    %405 = vperm.xlu0 %404, %v387
    %v406 = vpop.permute.xlu0 %405
    %v412 = vunpack.c.l.b16 %v377
    %v413 = vunpack.c.l.b16 %v378
    %v414 = vunpack.c.l.b16 %v379
    %v415 = vunpack.c.l.b16 %v380
    %v416 = vpack.c.b16 %v413, %v412
    %v417 = vpack.c.b16 %v415, %v414
    %v419 = vsel %vm215, %v416, 0
    %v422 = vsel %vm215, %v417, 0
    %424 = vmatprep.subr.bf16.mxu0 0
    %425 = vmatpush1.bf16.msra.mxu0 0
    %426 = vmatprep.subr.bf16.mxu0 0
    %427 = vmatpush1.bf16.msra.mxu0 0
    %428 = vmatprep.subr.bf16.mxu0 0
    %429 = vmatpush1.bf16.msra.mxu0 0
    %430 = vmatprep.subr.bf16.mxu0 0
    %431 = vmatpush1.bf16.msra.mxu0 0
    %432 = vmatprep.subr.bf16.mxu0 0
    %433 = vmatpush1.bf16.msra.mxu0 0
    %434 = vmatprep.subr.bf16.mxu0 0
    %435 = vmatpush1.bf16.msra.mxu0 0
    %436 = vmatprep.subr.bf16.mxu0 0
    %437 = vmatpush1.bf16.msra.mxu0 %v382
    %438 = vmatprep.subr.bf16.mxu0 0
    %439 = vmatpush1.bf16.msra.mxu0 %v381
    %440 = vmatprep.subr.bf16.mxu0 0
    %441 = vmatpush2.bf16.msra.mxu0 0
    %442 = vmatprep.subr.bf16.mxu0 0
    %443 = vmatpush2.bf16.msra.mxu0 0
    %444 = vmatprep.subr.bf16.mxu0 0
    %445 = vmatpush2.bf16.msra.mxu0 0
    %446 = vmatprep.subr.bf16.mxu0 0
    %447 = vmatpush2.bf16.msra.mxu0 0
    %448 = vmatprep.subr.bf16.mxu0 0
    %449 = vmatpush2.bf16.msra.mxu0 0
    %450 = vmatprep.subr.bf16.mxu0 0
    %451 = vmatpush2.bf16.msra.mxu0 0
    %452 = vmatprep.subr.bf16.mxu0 0
    %453 = vmatpush2.bf16.msra.mxu0 0
    %454 = vmatprep.subr.bf16.mxu0 0
    %455 = vmatpush2.bf16.msra.mxu0 0
    %456 = vmatprep.mubr.bf16.mxu0 0
    %457 = vmatmul.mubr.bf16.gmra.mxu0 %v419
    %v458 = vpop.f32.mrf.mxu0
    %v459 = vadd.f32 %v391, %v458
    %v460 = vpop.f32.mrf.mxu0
    %v461 = vpop.f32.mrf.mxu0
    %v462 = vadd.f32 %v396, %v461
    %v463 = vpop.f32.mrf.mxu0
    %464 = vmatprep.mubr.bf16.mxu0 0
    %465 = vmatmul.mubr.bf16.gmra.mxu0 %v422
    %v466 = vpop.f32.mrf.mxu0
    %v467 = vadd.f32 %v401, %v466
    %v468 = vpop.f32.mrf.mxu0
    %v469 = vpop.f32.mrf.mxu0
    %v470 = vadd.f32 %v406, %v469
    %v471 = vpop.f32.mrf.mxu0
    %472 = vdwg.mxu0
    %v473 = vmax.f32 %v459, 0.0
    %v474 = vmax.f32 %v462, 0.0
    %v475 = vmax.f32 %v467, 0.0
    %v476 = vmax.f32 %v470, 0.0
    %v477 = vld [vmem:[%s5] sm:$0xf]
    %v478 = vld [vmem:[%s5 + $0x4] sm:$0xf]
    %v479 = vld [vmem:[%s5 + $0x8] sm:$0xf]
    %v480 = vpack.c.bf16 %v474, %v473
    %v481 = vpack.c.bf16 %v476, %v475
    %v482 = vld [vmem:[%s6] sm:$0xff]
    %v483 = vld [vmem:[%s6 + $0x8] sm:$0xff]
    %v484 = vld [vmem:[%s6 + $0x10] sm:$0xff]
    %486 = vset.pattern.permute.xlu0 0
    %487 = vperm.xlu0 %486, %v482
    %v488 = vpop.permute.xlu0 %487
    %491 = vset.pattern.permute.xlu0 0
    %492 = vperm.xlu0 %491, %v483
    %v493 = vpop.permute.xlu0 %492
    %496 = vset.pattern.permute.xlu0 0
    %497 = vperm.xlu0 %496, %v484
    %v498 = vpop.permute.xlu0 %497
    %v503 = vunpack.c.l.b16 %v477
    %v504 = vunpack.c.l.b16 %v478
    %v505 = vunpack.c.l.b16 %v479
    %v506 = vpack.c.b16 %v504, %v503
    %v507 = vpack.c.b16 %v505, %v505
    %v509 = vsel %vm215, %v506, 0
    %v512 = vsel %vm215, %v507, 0
    %514 = vmatprep.subr.bf16.mxu0 0
    %515 = vmatpush1.bf16.msra.mxu0 0
    %516 = vmatprep.subr.bf16.mxu0 0
    %517 = vmatpush1.bf16.msra.mxu0 0
    %518 = vmatprep.subr.bf16.mxu0 0
    %519 = vmatpush1.bf16.msra.mxu0 0
    %520 = vmatprep.subr.bf16.mxu0 0
    %521 = vmatpush1.bf16.msra.mxu0 0
    %522 = vmatprep.subr.bf16.mxu0 0
    %523 = vmatpush1.bf16.msra.mxu0 0
    %524 = vmatprep.subr.bf16.mxu0 0
    %525 = vmatpush1.bf16.msra.mxu0 0
    %526 = vmatprep.subr.bf16.mxu0 0
    %527 = vmatpush1.bf16.msra.mxu0 %v481
    %528 = vmatprep.subr.bf16.mxu0 0
    %529 = vmatpush1.bf16.msra.mxu0 %v480
    %530 = vmatprep.subr.bf16.mxu0 0
    %531 = vmatpush2.bf16.msra.mxu0 0
    %532 = vmatprep.subr.bf16.mxu0 0
    %533 = vmatpush2.bf16.msra.mxu0 0
    %534 = vmatprep.subr.bf16.mxu0 0
    %535 = vmatpush2.bf16.msra.mxu0 0
    %536 = vmatprep.subr.bf16.mxu0 0
    %537 = vmatpush2.bf16.msra.mxu0 0
    %538 = vmatprep.subr.bf16.mxu0 0
    %539 = vmatpush2.bf16.msra.mxu0 0
    %540 = vmatprep.subr.bf16.mxu0 0
    %541 = vmatpush2.bf16.msra.mxu0 0
    %542 = vmatprep.subr.bf16.mxu0 0
    %543 = vmatpush2.bf16.msra.mxu0 0
    %544 = vmatprep.subr.bf16.mxu0 0
    %545 = vmatpush2.bf16.msra.mxu0 0
    %546 = vmatprep.mubr.bf16.mxu0 0
    %547 = vmatmul.mubr.bf16.gmra.mxu0 %v509
    %v548 = vpop.f32.mrf.mxu0
    %v549 = vadd.f32 %v488, %v548
    %v550 = vpop.f32.mrf.mxu0
    %v551 = vpop.f32.mrf.mxu0
    %v552 = vadd.f32 %v493, %v551
    %v553 = vpop.f32.mrf.mxu0
    %554 = vmatprep.mubr.bf16.mxu0 0
    %555 = vmatmul.mubr.bf16.gmra.mxu0 %v512
    %v556 = vpop.f32.mrf.mxu0
    %v557 = vadd.f32 %v498, %v556
    %v558 = vpop.f32.mrf.mxu0
    %v559 = vpop.f32.mrf.mxu0
    %v560 = vpop.f32.mrf.mxu0
    %561 = vdwg.mxu0
    %v562 = vsub.f32 %v60, %v549
    %v563 = vsub.f32 %v61, %v552
    %v564 = vadd.f32 %v557, 0.0
    %s565 = scalar_lea.vmem %s1, 16
    %v566 = vld [vmem:[%s565] sm:$0xf]
    %v567 = vld [vmem:[%s565 + $0x4] sm:$0xf]
    %v568 = vld [vmem:[%s565 + $0x8] sm:$0xf]
    %v569 = vld [vmem:[%s565 + $0xc] sm:$0xf]
    %v570 = vpack.c.bf16 %v563, %v562
    %s571 = scalar_lea.vmem %s2, 32
    %v572 = vld [vmem:[%s571] sm:$0xff]
    %v573 = vld [vmem:[%s571 + $0x8] sm:$0xff]
    %v574 = vld [vmem:[%s571 + $0x10] sm:$0xff]
    %v575 = vld [vmem:[%s571 + $0x18] sm:$0xff]
    %577 = vset.pattern.permute.xlu0 0
    %578 = vperm.xlu0 %577, %v572
    %v579 = vpop.permute.xlu0 %578
    %582 = vset.pattern.permute.xlu0 0
    %583 = vperm.xlu0 %582, %v573
    %v584 = vpop.permute.xlu0 %583
    %587 = vset.pattern.permute.xlu0 0
    %588 = vperm.xlu0 %587, %v574
    %v589 = vpop.permute.xlu0 %588
    %592 = vset.pattern.permute.xlu0 0
    %593 = vperm.xlu0 %592, %v575
    %v594 = vpop.permute.xlu0 %593
    %v600 = vunpack.c.l.b16 %v566
    %v601 = vunpack.c.l.b16 %v567
    %v602 = vunpack.c.l.b16 %v568
    %v603 = vunpack.c.l.b16 %v569
    %v604 = vpack.c.b16 %v601, %v600
    %v605 = vpack.c.b16 %v603, %v602
    %v607 = vsel %vm115, %v604, 0
    %v610 = vsel %vm115, %v605, 0
    %612 = vmatprep.subr.bf16.mxu0 0
    %613 = vmatpush1.bf16.msra.mxu0 0
    %614 = vmatprep.subr.bf16.mxu0 0
    %615 = vmatpush1.bf16.msra.mxu0 0
    %616 = vmatprep.subr.bf16.mxu0 0
    %617 = vmatpush1.bf16.msra.mxu0 0
    %618 = vmatprep.subr.bf16.mxu0 0
    %619 = vmatpush1.bf16.msra.mxu0 0
    %620 = vmatprep.subr.bf16.mxu0 0
    %621 = vmatpush1.bf16.msra.mxu0 0
    %622 = vmatprep.subr.bf16.mxu0 0
    %623 = vmatpush1.bf16.msra.mxu0 0
    %624 = vmatprep.subr.bf16.mxu0 0
    %625 = vmatpush1.bf16.msra.mxu0 0
    %626 = vmatprep.subr.bf16.mxu0 0
    %627 = vmatpush1.bf16.msra.mxu0 %v570
    %628 = vmatprep.subr.bf16.mxu0 0
    %629 = vmatpush2.bf16.msra.mxu0 0
    %630 = vmatprep.subr.bf16.mxu0 0
    %631 = vmatpush2.bf16.msra.mxu0 0
    %632 = vmatprep.subr.bf16.mxu0 0
    %633 = vmatpush2.bf16.msra.mxu0 0
    %634 = vmatprep.subr.bf16.mxu0 0
    %635 = vmatpush2.bf16.msra.mxu0 0
    %636 = vmatprep.subr.bf16.mxu0 0
    %637 = vmatpush2.bf16.msra.mxu0 0
    %638 = vmatprep.subr.bf16.mxu0 0
    %639 = vmatpush2.bf16.msra.mxu0 0
    %640 = vmatprep.subr.bf16.mxu0 0
    %641 = vmatpush2.bf16.msra.mxu0 0
    %642 = vmatprep.subr.bf16.mxu0 0
    %643 = vmatpush2.bf16.msra.mxu0 0
    %644 = vmatprep.mubr.bf16.mxu0 0
    %645 = vmatmul.mubr.bf16.gmra.mxu0 %v607
    %v646 = vpop.f32.mrf.mxu0
    %v647 = vadd.f32 %v579, %v646
    %v648 = vpop.f32.mrf.mxu0
    %v649 = vpop.f32.mrf.mxu0
    %v650 = vadd.f32 %v584, %v649
    %v651 = vpop.f32.mrf.mxu0
    %652 = vmatprep.mubr.bf16.mxu0 0
    %653 = vmatmul.mubr.bf16.gmra.mxu0 %v610
    %v654 = vpop.f32.mrf.mxu0
    %v655 = vadd.f32 %v589, %v654
    %v656 = vpop.f32.mrf.mxu0
    %v657 = vpop.f32.mrf.mxu0
    %v658 = vadd.f32 %v594, %v657
    %v659 = vpop.f32.mrf.mxu0
    %660 = vdwg.mxu0
    %v661 = vmax.f32 %v647, 0.0
    %v662 = vmax.f32 %v650, 0.0
    %v663 = vmax.f32 %v655, 0.0
    %v664 = vmax.f32 %v658, 0.0
    %s665 = scalar_lea.vmem %s3, 48
    %v666 = vld [vmem:[%s665] sm:$0xf]
    %v667 = vld [vmem:[%s665 + $0x4] sm:$0xf]
    %v668 = vld [vmem:[%s665 + $0x8] sm:$0xf]
    %v669 = vld [vmem:[%s665 + $0xc] sm:$0xf]
    %v670 = vpack.c.bf16 %v662, %v661
    %v671 = vpack.c.bf16 %v664, %v663
    %s672 = scalar_lea.vmem %s4, 96
    %v673 = vld [vmem:[%s672] sm:$0xff]
    %v674 = vld [vmem:[%s672 + $0x8] sm:$0xff]
    %v675 = vld [vmem:[%s672 + $0x10] sm:$0xff]
    %v676 = vld [vmem:[%s672 + $0x18] sm:$0xff]
    %678 = vset.pattern.permute.xlu0 0
    %679 = vperm.xlu0 %678, %v673
    %v680 = vpop.permute.xlu0 %679
    %683 = vset.pattern.permute.xlu0 0
    %684 = vperm.xlu0 %683, %v674
    %v685 = vpop.permute.xlu0 %684
    %688 = vset.pattern.permute.xlu0 0
    %689 = vperm.xlu0 %688, %v675
    %v690 = vpop.permute.xlu0 %689
    %693 = vset.pattern.permute.xlu0 0
    %694 = vperm.xlu0 %693, %v676
    %v695 = vpop.permute.xlu0 %694
    %v701 = vunpack.c.l.b16 %v666
    %v702 = vunpack.c.l.b16 %v667
    %v703 = vunpack.c.l.b16 %v668
    %v704 = vunpack.c.l.b16 %v669
    %v705 = vpack.c.b16 %v702, %v701
    %v706 = vpack.c.b16 %v704, %v703
    %v708 = vsel %vm215, %v705, 0
    %v711 = vsel %vm215, %v706, 0
    %713 = vmatprep.subr.bf16.mxu0 0
    %714 = vmatpush1.bf16.msra.mxu0 0
    %715 = vmatprep.subr.bf16.mxu0 0
    %716 = vmatpush1.bf16.msra.mxu0 0
    %717 = vmatprep.subr.bf16.mxu0 0
    %718 = vmatpush1.bf16.msra.mxu0 0
    %719 = vmatprep.subr.bf16.mxu0 0
    %720 = vmatpush1.bf16.msra.mxu0 0
    %721 = vmatprep.subr.bf16.mxu0 0
    %722 = vmatpush1.bf16.msra.mxu0 0
    %723 = vmatprep.subr.bf16.mxu0 0
    %724 = vmatpush1.bf16.msra.mxu0 0
    %725 = vmatprep.subr.bf16.mxu0 0
    %726 = vmatpush1.bf16.msra.mxu0 %v671
    %727 = vmatprep.subr.bf16.mxu0 0
    %728 = vmatpush1.bf16.msra.mxu0 %v670
    %729 = vmatprep.subr.bf16.mxu0 0
    %730 = vmatpush2.bf16.msra.mxu0 0
    %731 = vmatprep.subr.bf16.mxu0 0
    %732 = vmatpush2.bf16.msra.mxu0 0
    %733 = vmatprep.subr.bf16.mxu0 0
    %734 = vmatpush2.bf16.msra.mxu0 0
    %735 = vmatprep.subr.bf16.mxu0 0
    %736 = vmatpush2.bf16.msra.mxu0 0
    %737 = vmatprep.subr.bf16.mxu0 0
    %738 = vmatpush2.bf16.msra.mxu0 0
    %739 = vmatprep.subr.bf16.mxu0 0
    %740 = vmatpush2.bf16.msra.mxu0 0
    %741 = vmatprep.subr.bf16.mxu0 0
    %742 = vmatpush2.bf16.msra.mxu0 0
    %743 = vmatprep.subr.bf16.mxu0 0
    %744 = vmatpush2.bf16.msra.mxu0 0
    %745 = vmatprep.mubr.bf16.mxu0 0
    %746 = vmatmul.mubr.bf16.gmra.mxu0 %v708
    %v747 = vpop.f32.mrf.mxu0
    %v748 = vadd.f32 %v680, %v747
    %v749 = vpop.f32.mrf.mxu0
    %v750 = vpop.f32.mrf.mxu0
    %v751 = vadd.f32 %v685, %v750
    %v752 = vpop.f32.mrf.mxu0
    %753 = vmatprep.mubr.bf16.mxu0 0
    %754 = vmatmul.mubr.bf16.gmra.mxu0 %v711
    %v755 = vpop.f32.mrf.mxu0
    %v756 = vadd.f32 %v690, %v755
    %v757 = vpop.f32.mrf.mxu0
    %v758 = vpop.f32.mrf.mxu0
    %v759 = vadd.f32 %v695, %v758
    %v760 = vpop.f32.mrf.mxu0
    %761 = vdwg.mxu0
    %v762 = vmax.f32 %v748, 0.0
    %v763 = vmax.f32 %v751, 0.0
    %v764 = vmax.f32 %v756, 0.0
    %v765 = vmax.f32 %v759, 0.0
    %s766 = scalar_lea.vmem %s3, 64
    %v767 = vld [vmem:[%s766] sm:$0xf]
    %v768 = vld [vmem:[%s766 + $0x4] sm:$0xf]
    %v769 = vld [vmem:[%s766 + $0x8] sm:$0xf]
    %v770 = vld [vmem:[%s766 + $0xc] sm:$0xf]
    %v771 = vpack.c.bf16 %v763, %v762
    %v772 = vpack.c.bf16 %v765, %v764
    %s773 = scalar_lea.vmem %s4, 128
    %v774 = vld [vmem:[%s773] sm:$0xff]
    %v775 = vld [vmem:[%s773 + $0x8] sm:$0xff]
    %v776 = vld [vmem:[%s773 + $0x10] sm:$0xff]
    %v777 = vld [vmem:[%s773 + $0x18] sm:$0xff]
    %779 = vset.pattern.permute.xlu0 0
    %780 = vperm.xlu0 %779, %v774
    %v781 = vpop.permute.xlu0 %780
    %784 = vset.pattern.permute.xlu0 0
    %785 = vperm.xlu0 %784, %v775
    %v786 = vpop.permute.xlu0 %785
    %789 = vset.pattern.permute.xlu0 0
    %790 = vperm.xlu0 %789, %v776
    %v791 = vpop.permute.xlu0 %790
    %794 = vset.pattern.permute.xlu0 0
    %795 = vperm.xlu0 %794, %v777
    %v796 = vpop.permute.xlu0 %795
    %v802 = vunpack.c.l.b16 %v767
    %v803 = vunpack.c.l.b16 %v768
    %v804 = vunpack.c.l.b16 %v769
    %v805 = vunpack.c.l.b16 %v770
    %v806 = vpack.c.b16 %v803, %v802
    %v807 = vpack.c.b16 %v805, %v804
    %v809 = vsel %vm215, %v806, 0
    %v812 = vsel %vm215, %v807, 0
    %814 = vmatprep.subr.bf16.mxu0 0
    %815 = vmatpush1.bf16.msra.mxu0 0
    %816 = vmatprep.subr.bf16.mxu0 0
    %817 = vmatpush1.bf16.msra.mxu0 0
    %818 = vmatprep.subr.bf16.mxu0 0
    %819 = vmatpush1.bf16.msra.mxu0 0
    %820 = vmatprep.subr.bf16.mxu0 0
    %821 = vmatpush1.bf16.msra.mxu0 0
    %822 = vmatprep.subr.bf16.mxu0 0
    %823 = vmatpush1.bf16.msra.mxu0 0
    %824 = vmatprep.subr.bf16.mxu0 0
    %825 = vmatpush1.bf16.msra.mxu0 0
    %826 = vmatprep.subr.bf16.mxu0 0
    %827 = vmatpush1.bf16.msra.mxu0 %v772
    %828 = vmatprep.subr.bf16.mxu0 0
    %829 = vmatpush1.bf16.msra.mxu0 %v771
    %830 = vmatprep.subr.bf16.mxu0 0
    %831 = vmatpush2.bf16.msra.mxu0 0
    %832 = vmatprep.subr.bf16.mxu0 0
    %833 = vmatpush2.bf16.msra.mxu0 0
    %834 = vmatprep.subr.bf16.mxu0 0
    %835 = vmatpush2.bf16.msra.mxu0 0
    %836 = vmatprep.subr.bf16.mxu0 0
    %837 = vmatpush2.bf16.msra.mxu0 0
    %838 = vmatprep.subr.bf16.mxu0 0
    %839 = vmatpush2.bf16.msra.mxu0 0
    %840 = vmatprep.subr.bf16.mxu0 0
    %841 = vmatpush2.bf16.msra.mxu0 0
    %842 = vmatprep.subr.bf16.mxu0 0
    %843 = vmatpush2.bf16.msra.mxu0 0
    %844 = vmatprep.subr.bf16.mxu0 0
    %845 = vmatpush2.bf16.msra.mxu0 0
    %846 = vmatprep.mubr.bf16.mxu0 0
    %847 = vmatmul.mubr.bf16.gmra.mxu0 %v809
    %v848 = vpop.f32.mrf.mxu0
    %v849 = vadd.f32 %v781, %v848
    %v850 = vpop.f32.mrf.mxu0
    %v851 = vpop.f32.mrf.mxu0
    %v852 = vadd.f32 %v786, %v851
    %v853 = vpop.f32.mrf.mxu0
    %854 = vmatprep.mubr.bf16.mxu0 0
    %855 = vmatmul.mubr.bf16.gmra.mxu0 %v812
    %v856 = vpop.f32.mrf.mxu0
    %v857 = vadd.f32 %v791, %v856
    %v858 = vpop.f32.mrf.mxu0
    %v859 = vpop.f32.mrf.mxu0
    %v860 = vadd.f32 %v796, %v859
    %v861 = vpop.f32.mrf.mxu0
    %862 = vdwg.mxu0
    %v863 = vmax.f32 %v849, 0.0
    %v864 = vmax.f32 %v852, 0.0
    %v865 = vmax.f32 %v857, 0.0
    %v866 = vmax.f32 %v860, 0.0
    %s867 = scalar_lea.vmem %s3, 80
    %v868 = vld [vmem:[%s867] sm:$0xf]
    %v869 = vld [vmem:[%s867 + $0x4] sm:$0xf]
    %v870 = vld [vmem:[%s867 + $0x8] sm:$0xf]
    %v871 = vld [vmem:[%s867 + $0xc] sm:$0xf]
    %v872 = vpack.c.bf16 %v864, %v863
    %v873 = vpack.c.bf16 %v866, %v865
    %s874 = scalar_lea.vmem %s4, 160
    %v875 = vld [vmem:[%s874] sm:$0xff]
    %v876 = vld [vmem:[%s874 + $0x8] sm:$0xff]
    %v877 = vld [vmem:[%s874 + $0x10] sm:$0xff]
    %v878 = vld [vmem:[%s874 + $0x18] sm:$0xff]
    %880 = vset.pattern.permute.xlu0 0
    %881 = vperm.xlu0 %880, %v875
    %v882 = vpop.permute.xlu0 %881
    %885 = vset.pattern.permute.xlu0 0
    %886 = vperm.xlu0 %885, %v876
    %v887 = vpop.permute.xlu0 %886
    %890 = vset.pattern.permute.xlu0 0
    %891 = vperm.xlu0 %890, %v877
    %v892 = vpop.permute.xlu0 %891
    %895 = vset.pattern.permute.xlu0 0
    %896 = vperm.xlu0 %895, %v878
    %v897 = vpop.permute.xlu0 %896
    %v903 = vunpack.c.l.b16 %v868
    %v904 = vunpack.c.l.b16 %v869
    %v905 = vunpack.c.l.b16 %v870
    %v906 = vunpack.c.l.b16 %v871
    %v907 = vpack.c.b16 %v904, %v903
    %v908 = vpack.c.b16 %v906, %v905
    %v910 = vsel %vm215, %v907, 0
    %v913 = vsel %vm215, %v908, 0
    %915 = vmatprep.subr.bf16.mxu0 0
    %916 = vmatpush1.bf16.msra.mxu0 0
    %917 = vmatprep.subr.bf16.mxu0 0
    %918 = vmatpush1.bf16.msra.mxu0 0
    %919 = vmatprep.subr.bf16.mxu0 0
    %920 = vmatpush1.bf16.msra.mxu0 0
    %921 = vmatprep.subr.bf16.mxu0 0
    %922 = vmatpush1.bf16.msra.mxu0 0
    %923 = vmatprep.subr.bf16.mxu0 0
    %924 = vmatpush1.bf16.msra.mxu0 0
    %925 = vmatprep.subr.bf16.mxu0 0
    %926 = vmatpush1.bf16.msra.mxu0 0
    %927 = vmatprep.subr.bf16.mxu0 0
    %928 = vmatpush1.bf16.msra.mxu0 %v873
    %929 = vmatprep.subr.bf16.mxu0 0
    %930 = vmatpush1.bf16.msra.mxu0 %v872
    %931 = vmatprep.subr.bf16.mxu0 0
    %932 = vmatpush2.bf16.msra.mxu0 0
    %933 = vmatprep.subr.bf16.mxu0 0
    %934 = vmatpush2.bf16.msra.mxu0 0
    %935 = vmatprep.subr.bf16.mxu0 0
    %936 = vmatpush2.bf16.msra.mxu0 0
    %937 = vmatprep.subr.bf16.mxu0 0
    %938 = vmatpush2.bf16.msra.mxu0 0
    %939 = vmatprep.subr.bf16.mxu0 0
    %940 = vmatpush2.bf16.msra.mxu0 0
    %941 = vmatprep.subr.bf16.mxu0 0
    %942 = vmatpush2.bf16.msra.mxu0 0
    %943 = vmatprep.subr.bf16.mxu0 0
    %944 = vmatpush2.bf16.msra.mxu0 0
    %945 = vmatprep.subr.bf16.mxu0 0
    %946 = vmatpush2.bf16.msra.mxu0 0
    %947 = vmatprep.mubr.bf16.mxu0 0
    %948 = vmatmul.mubr.bf16.gmra.mxu0 %v910
    %v949 = vpop.f32.mrf.mxu0
    %v950 = vadd.f32 %v882, %v949
    %v951 = vpop.f32.mrf.mxu0
    %v952 = vpop.f32.mrf.mxu0
    %v953 = vadd.f32 %v887, %v952
    %v954 = vpop.f32.mrf.mxu0
    %955 = vmatprep.mubr.bf16.mxu0 0
    %956 = vmatmul.mubr.bf16.gmra.mxu0 %v913
    %v957 = vpop.f32.mrf.mxu0
    %v958 = vadd.f32 %v892, %v957
    %v959 = vpop.f32.mrf.mxu0
    %v960 = vpop.f32.mrf.mxu0
    %v961 = vadd.f32 %v897, %v960
    %v962 = vpop.f32.mrf.mxu0
    %963 = vdwg.mxu0
    %v964 = vmax.f32 %v950, 0.0
    %v965 = vmax.f32 %v953, 0.0
    %v966 = vmax.f32 %v958, 0.0
    %v967 = vmax.f32 %v961, 0.0
    %s968 = scalar_lea.vmem %s5, 12
    %v969 = vld [vmem:[%s968] sm:$0xf]
    %v970 = vld [vmem:[%s968 + $0x4] sm:$0xf]
    %v971 = vld [vmem:[%s968 + $0x8] sm:$0xf]
    %v972 = vpack.c.bf16 %v965, %v964
    %v973 = vpack.c.bf16 %v967, %v966
    %s974 = scalar_lea.vmem %s6, 24
    %v975 = vld [vmem:[%s974] sm:$0xff]
    %v976 = vld [vmem:[%s974 + $0x8] sm:$0xff]
    %v977 = vld [vmem:[%s974 + $0x10] sm:$0xff]
    %979 = vset.pattern.permute.xlu0 0
    %980 = vperm.xlu0 %979, %v975
    %v981 = vpop.permute.xlu0 %980
    %984 = vset.pattern.permute.xlu0 0
    %985 = vperm.xlu0 %984, %v976
    %v986 = vpop.permute.xlu0 %985
    %989 = vset.pattern.permute.xlu0 0
    %990 = vperm.xlu0 %989, %v977
    %v991 = vpop.permute.xlu0 %990
    %v996 = vunpack.c.l.b16 %v969
    %v997 = vunpack.c.l.b16 %v970
    %v998 = vunpack.c.l.b16 %v971
    %v999 = vpack.c.b16 %v997, %v996
    %v1000 = vpack.c.b16 %v998, %v998
    %v1002 = vsel %vm215, %v999, 0
    %v1005 = vsel %vm215, %v1000, 0
    %1007 = vmatprep.subr.bf16.mxu0 0
    %1008 = vmatpush1.bf16.msra.mxu0 0
    %1009 = vmatprep.subr.bf16.mxu0 0
    %1010 = vmatpush1.bf16.msra.mxu0 0
    %1011 = vmatprep.subr.bf16.mxu0 0
    %1012 = vmatpush1.bf16.msra.mxu0 0
    %1013 = vmatprep.subr.bf16.mxu0 0
    %1014 = vmatpush1.bf16.msra.mxu0 0
    %1015 = vmatprep.subr.bf16.mxu0 0
    %1016 = vmatpush1.bf16.msra.mxu0 0
    %1017 = vmatprep.subr.bf16.mxu0 0
    %1018 = vmatpush1.bf16.msra.mxu0 0
    %1019 = vmatprep.subr.bf16.mxu0 0
    %1020 = vmatpush1.bf16.msra.mxu0 %v973
    %1021 = vmatprep.subr.bf16.mxu0 0
    %1022 = vmatpush1.bf16.msra.mxu0 %v972
    %1023 = vmatprep.subr.bf16.mxu0 0
    %1024 = vmatpush2.bf16.msra.mxu0 0
    %1025 = vmatprep.subr.bf16.mxu0 0
    %1026 = vmatpush2.bf16.msra.mxu0 0
    %1027 = vmatprep.subr.bf16.mxu0 0
    %1028 = vmatpush2.bf16.msra.mxu0 0
    %1029 = vmatprep.subr.bf16.mxu0 0
    %1030 = vmatpush2.bf16.msra.mxu0 0
    %1031 = vmatprep.subr.bf16.mxu0 0
    %1032 = vmatpush2.bf16.msra.mxu0 0
    %1033 = vmatprep.subr.bf16.mxu0 0
    %1034 = vmatpush2.bf16.msra.mxu0 0
    %1035 = vmatprep.subr.bf16.mxu0 0
    %1036 = vmatpush2.bf16.msra.mxu0 0
    %1037 = vmatprep.subr.bf16.mxu0 0
    %1038 = vmatpush2.bf16.msra.mxu0 0
    %1039 = vmatprep.mubr.bf16.mxu0 0
    %1040 = vmatmul.mubr.bf16.gmra.mxu0 %v1002
    %v1041 = vpop.f32.mrf.mxu0
    %v1042 = vadd.f32 %v981, %v1041
    %v1043 = vpop.f32.mrf.mxu0
    %v1044 = vpop.f32.mrf.mxu0
    %v1045 = vadd.f32 %v986, %v1044
    %v1046 = vpop.f32.mrf.mxu0
    %1047 = vmatprep.mubr.bf16.mxu0 0
    %1048 = vmatmul.mubr.bf16.gmra.mxu0 %v1005
    %v1049 = vpop.f32.mrf.mxu0
    %v1050 = vadd.f32 %v991, %v1049
    %v1051 = vpop.f32.mrf.mxu0
    %v1052 = vpop.f32.mrf.mxu0
    %v1053 = vpop.f32.mrf.mxu0
    %1054 = vdwg.mxu0
    %v1055 = vsub.f32 %v562, %v1042
    %v1056 = vsub.f32 %v563, %v1045
    %v1057 = vadd.f32 %v564, %v1050
    %s1058 = scalar_lea.vmem %s1, 32
    %v1059 = vld [vmem:[%s1058] sm:$0xf]
    %v1060 = vld [vmem:[%s1058 + $0x4] sm:$0xf]
    %v1061 = vld [vmem:[%s1058 + $0x8] sm:$0xf]
    %v1062 = vld [vmem:[%s1058 + $0xc] sm:$0xf]
    %v1063 = vpack.c.bf16 %v1056, %v1055
    %s1064 = scalar_lea.vmem %s2, 64
    %v1065 = vld [vmem:[%s1064] sm:$0xff]
    %v1066 = vld [vmem:[%s1064 + $0x8] sm:$0xff]
    %v1067 = vld [vmem:[%s1064 + $0x10] sm:$0xff]
    %v1068 = vld [vmem:[%s1064 + $0x18] sm:$0xff]
    %1070 = vset.pattern.permute.xlu0 0
    %1071 = vperm.xlu0 %1070, %v1065
    %v1072 = vpop.permute.xlu0 %1071
    %1075 = vset.pattern.permute.xlu0 0
    %1076 = vperm.xlu0 %1075, %v1066
    %v1077 = vpop.permute.xlu0 %1076
    %1080 = vset.pattern.permute.xlu0 0
    %1081 = vperm.xlu0 %1080, %v1067
    %v1082 = vpop.permute.xlu0 %1081
    %1085 = vset.pattern.permute.xlu0 0
    %1086 = vperm.xlu0 %1085, %v1068
    %v1087 = vpop.permute.xlu0 %1086
    %v1093 = vunpack.c.l.b16 %v1059
    %v1094 = vunpack.c.l.b16 %v1060
    %v1095 = vunpack.c.l.b16 %v1061
    %v1096 = vunpack.c.l.b16 %v1062
    %v1097 = vpack.c.b16 %v1094, %v1093
    %v1098 = vpack.c.b16 %v1096, %v1095
    %v1100 = vsel %vm115, %v1097, 0
    %v1103 = vsel %vm115, %v1098, 0
    %1105 = vmatprep.subr.bf16.mxu0 0
    %1106 = vmatpush1.bf16.msra.mxu0 0
    %1107 = vmatprep.subr.bf16.mxu0 0
    %1108 = vmatpush1.bf16.msra.mxu0 0
    %1109 = vmatprep.subr.bf16.mxu0 0
    %1110 = vmatpush1.bf16.msra.mxu0 0
    %1111 = vmatprep.subr.bf16.mxu0 0
    %1112 = vmatpush1.bf16.msra.mxu0 0
    %1113 = vmatprep.subr.bf16.mxu0 0
    %1114 = vmatpush1.bf16.msra.mxu0 0
    %1115 = vmatprep.subr.bf16.mxu0 0
    %1116 = vmatpush1.bf16.msra.mxu0 0
    %1117 = vmatprep.subr.bf16.mxu0 0
    %1118 = vmatpush1.bf16.msra.mxu0 0
    %1119 = vmatprep.subr.bf16.mxu0 0
    %1120 = vmatpush1.bf16.msra.mxu0 %v1063
    %1121 = vmatprep.subr.bf16.mxu0 0
    %1122 = vmatpush2.bf16.msra.mxu0 0
    %1123 = vmatprep.subr.bf16.mxu0 0
    %1124 = vmatpush2.bf16.msra.mxu0 0
    %1125 = vmatprep.subr.bf16.mxu0 0
    %1126 = vmatpush2.bf16.msra.mxu0 0
    %1127 = vmatprep.subr.bf16.mxu0 0
    %1128 = vmatpush2.bf16.msra.mxu0 0
    %1129 = vmatprep.subr.bf16.mxu0 0
    %1130 = vmatpush2.bf16.msra.mxu0 0
    %1131 = vmatprep.subr.bf16.mxu0 0
    %1132 = vmatpush2.bf16.msra.mxu0 0
    %1133 = vmatprep.subr.bf16.mxu0 0
    %1134 = vmatpush2.bf16.msra.mxu0 0
    %1135 = vmatprep.subr.bf16.mxu0 0
    %1136 = vmatpush2.bf16.msra.mxu0 0
    %1137 = vmatprep.mubr.bf16.mxu0 0
    %1138 = vmatmul.mubr.bf16.gmra.mxu0 %v1100
    %v1139 = vpop.f32.mrf.mxu0
    %v1140 = vadd.f32 %v1072, %v1139
    %v1141 = vpop.f32.mrf.mxu0
    %v1142 = vpop.f32.mrf.mxu0
    %v1143 = vadd.f32 %v1077, %v1142
    %v1144 = vpop.f32.mrf.mxu0
    %1145 = vmatprep.mubr.bf16.mxu0 0
    %1146 = vmatmul.mubr.bf16.gmra.mxu0 %v1103
    %v1147 = vpop.f32.mrf.mxu0
    %v1148 = vadd.f32 %v1082, %v1147
    %v1149 = vpop.f32.mrf.mxu0
    %v1150 = vpop.f32.mrf.mxu0
    %v1151 = vadd.f32 %v1087, %v1150
    %v1152 = vpop.f32.mrf.mxu0
    %1153 = vdwg.mxu0
    %v1154 = vmax.f32 %v1140, 0.0
    %v1155 = vmax.f32 %v1143, 0.0
    %v1156 = vmax.f32 %v1148, 0.0
    %v1157 = vmax.f32 %v1151, 0.0
    %s1158 = scalar_lea.vmem %s3, 96
    %v1159 = vld [vmem:[%s1158] sm:$0xf]
    %v1160 = vld [vmem:[%s1158 + $0x4] sm:$0xf]
    %v1161 = vld [vmem:[%s1158 + $0x8] sm:$0xf]
    %v1162 = vld [vmem:[%s1158 + $0xc] sm:$0xf]
    %v1163 = vpack.c.bf16 %v1155, %v1154
    %v1164 = vpack.c.bf16 %v1157, %v1156
    %s1165 = scalar_lea.vmem %s4, 192
    %v1166 = vld [vmem:[%s1165] sm:$0xff]
    %v1167 = vld [vmem:[%s1165 + $0x8] sm:$0xff]
    %v1168 = vld [vmem:[%s1165 + $0x10] sm:$0xff]
    %v1169 = vld [vmem:[%s1165 + $0x18] sm:$0xff]
    %1171 = vset.pattern.permute.xlu0 0
    %1172 = vperm.xlu0 %1171, %v1166
    %v1173 = vpop.permute.xlu0 %1172
    %1176 = vset.pattern.permute.xlu0 0
    %1177 = vperm.xlu0 %1176, %v1167
    %v1178 = vpop.permute.xlu0 %1177
    %1181 = vset.pattern.permute.xlu0 0
    %1182 = vperm.xlu0 %1181, %v1168
    %v1183 = vpop.permute.xlu0 %1182
    %1186 = vset.pattern.permute.xlu0 0
    %1187 = vperm.xlu0 %1186, %v1169
    %v1188 = vpop.permute.xlu0 %1187
    %v1194 = vunpack.c.l.b16 %v1159
    %v1195 = vunpack.c.l.b16 %v1160
    %v1196 = vunpack.c.l.b16 %v1161
    %v1197 = vunpack.c.l.b16 %v1162
    %v1198 = vpack.c.b16 %v1195, %v1194
    %v1199 = vpack.c.b16 %v1197, %v1196
    %v1201 = vsel %vm215, %v1198, 0
    %v1204 = vsel %vm215, %v1199, 0
    %1206 = vmatprep.subr.bf16.mxu0 0
    %1207 = vmatpush1.bf16.msra.mxu0 0
    %1208 = vmatprep.subr.bf16.mxu0 0
    %1209 = vmatpush1.bf16.msra.mxu0 0
    %1210 = vmatprep.subr.bf16.mxu0 0
    %1211 = vmatpush1.bf16.msra.mxu0 0
    %1212 = vmatprep.subr.bf16.mxu0 0
    %1213 = vmatpush1.bf16.msra.mxu0 0
    %1214 = vmatprep.subr.bf16.mxu0 0
    %1215 = vmatpush1.bf16.msra.mxu0 0
    %1216 = vmatprep.subr.bf16.mxu0 0
    %1217 = vmatpush1.bf16.msra.mxu0 0
    %1218 = vmatprep.subr.bf16.mxu0 0
    %1219 = vmatpush1.bf16.msra.mxu0 %v1164
    %1220 = vmatprep.subr.bf16.mxu0 0
    %1221 = vmatpush1.bf16.msra.mxu0 %v1163
    %1222 = vmatprep.subr.bf16.mxu0 0
    %1223 = vmatpush2.bf16.msra.mxu0 0
    %1224 = vmatprep.subr.bf16.mxu0 0
    %1225 = vmatpush2.bf16.msra.mxu0 0
    %1226 = vmatprep.subr.bf16.mxu0 0
    %1227 = vmatpush2.bf16.msra.mxu0 0
    %1228 = vmatprep.subr.bf16.mxu0 0
    %1229 = vmatpush2.bf16.msra.mxu0 0
    %1230 = vmatprep.subr.bf16.mxu0 0
    %1231 = vmatpush2.bf16.msra.mxu0 0
    %1232 = vmatprep.subr.bf16.mxu0 0
    %1233 = vmatpush2.bf16.msra.mxu0 0
    %1234 = vmatprep.subr.bf16.mxu0 0
    %1235 = vmatpush2.bf16.msra.mxu0 0
    %1236 = vmatprep.subr.bf16.mxu0 0
    %1237 = vmatpush2.bf16.msra.mxu0 0
    %1238 = vmatprep.mubr.bf16.mxu0 0
    %1239 = vmatmul.mubr.bf16.gmra.mxu0 %v1201
    %v1240 = vpop.f32.mrf.mxu0
    %v1241 = vadd.f32 %v1173, %v1240
    %v1242 = vpop.f32.mrf.mxu0
    %v1243 = vpop.f32.mrf.mxu0
    %v1244 = vadd.f32 %v1178, %v1243
    %v1245 = vpop.f32.mrf.mxu0
    %1246 = vmatprep.mubr.bf16.mxu0 0
    %1247 = vmatmul.mubr.bf16.gmra.mxu0 %v1204
    %v1248 = vpop.f32.mrf.mxu0
    %v1249 = vadd.f32 %v1183, %v1248
    %v1250 = vpop.f32.mrf.mxu0
    %v1251 = vpop.f32.mrf.mxu0
    %v1252 = vadd.f32 %v1188, %v1251
    %v1253 = vpop.f32.mrf.mxu0
    %1254 = vdwg.mxu0
    %v1255 = vmax.f32 %v1241, 0.0
    %v1256 = vmax.f32 %v1244, 0.0
    %v1257 = vmax.f32 %v1249, 0.0
    %v1258 = vmax.f32 %v1252, 0.0
    %s1259 = scalar_lea.vmem %s3, 112
    %v1260 = vld [vmem:[%s1259] sm:$0xf]
    %v1261 = vld [vmem:[%s1259 + $0x4] sm:$0xf]
    %v1262 = vld [vmem:[%s1259 + $0x8] sm:$0xf]
    %v1263 = vld [vmem:[%s1259 + $0xc] sm:$0xf]
    %v1264 = vpack.c.bf16 %v1256, %v1255
    %v1265 = vpack.c.bf16 %v1258, %v1257
    %s1266 = scalar_lea.vmem %s4, 224
    %v1267 = vld [vmem:[%s1266] sm:$0xff]
    %v1268 = vld [vmem:[%s1266 + $0x8] sm:$0xff]
    %v1269 = vld [vmem:[%s1266 + $0x10] sm:$0xff]
    %v1270 = vld [vmem:[%s1266 + $0x18] sm:$0xff]
    %1272 = vset.pattern.permute.xlu0 0
    %1273 = vperm.xlu0 %1272, %v1267
    %v1274 = vpop.permute.xlu0 %1273
    %1277 = vset.pattern.permute.xlu0 0
    %1278 = vperm.xlu0 %1277, %v1268
    %v1279 = vpop.permute.xlu0 %1278
    %1282 = vset.pattern.permute.xlu0 0
    %1283 = vperm.xlu0 %1282, %v1269
    %v1284 = vpop.permute.xlu0 %1283
    %1287 = vset.pattern.permute.xlu0 0
    %1288 = vperm.xlu0 %1287, %v1270
    %v1289 = vpop.permute.xlu0 %1288
    %v1295 = vunpack.c.l.b16 %v1260
    %v1296 = vunpack.c.l.b16 %v1261
    %v1297 = vunpack.c.l.b16 %v1262
    %v1298 = vunpack.c.l.b16 %v1263
    %v1299 = vpack.c.b16 %v1296, %v1295
    %v1300 = vpack.c.b16 %v1298, %v1297
    %v1302 = vsel %vm215, %v1299, 0
    %v1305 = vsel %vm215, %v1300, 0
    %1307 = vmatprep.subr.bf16.mxu0 0
    %1308 = vmatpush1.bf16.msra.mxu0 0
    %1309 = vmatprep.subr.bf16.mxu0 0
    %1310 = vmatpush1.bf16.msra.mxu0 0
    %1311 = vmatprep.subr.bf16.mxu0 0
    %1312 = vmatpush1.bf16.msra.mxu0 0
    %1313 = vmatprep.subr.bf16.mxu0 0
    %1314 = vmatpush1.bf16.msra.mxu0 0
    %1315 = vmatprep.subr.bf16.mxu0 0
    %1316 = vmatpush1.bf16.msra.mxu0 0
    %1317 = vmatprep.subr.bf16.mxu0 0
    %1318 = vmatpush1.bf16.msra.mxu0 0
    %1319 = vmatprep.subr.bf16.mxu0 0
    %1320 = vmatpush1.bf16.msra.mxu0 %v1265
    %1321 = vmatprep.subr.bf16.mxu0 0
    %1322 = vmatpush1.bf16.msra.mxu0 %v1264
    %1323 = vmatprep.subr.bf16.mxu0 0
    %1324 = vmatpush2.bf16.msra.mxu0 0
    %1325 = vmatprep.subr.bf16.mxu0 0
    %1326 = vmatpush2.bf16.msra.mxu0 0
    %1327 = vmatprep.subr.bf16.mxu0 0
    %1328 = vmatpush2.bf16.msra.mxu0 0
    %1329 = vmatprep.subr.bf16.mxu0 0
    %1330 = vmatpush2.bf16.msra.mxu0 0
    %1331 = vmatprep.subr.bf16.mxu0 0
    %1332 = vmatpush2.bf16.msra.mxu0 0
    %1333 = vmatprep.subr.bf16.mxu0 0
    %1334 = vmatpush2.bf16.msra.mxu0 0
    %1335 = vmatprep.subr.bf16.mxu0 0
    %1336 = vmatpush2.bf16.msra.mxu0 0
    %1337 = vmatprep.subr.bf16.mxu0 0
    %1338 = vmatpush2.bf16.msra.mxu0 0
    %1339 = vmatprep.mubr.bf16.mxu0 0
    %1340 = vmatmul.mubr.bf16.gmra.mxu0 %v1302
    %v1341 = vpop.f32.mrf.mxu0
    %v1342 = vadd.f32 %v1274, %v1341
    %v1343 = vpop.f32.mrf.mxu0
    %v1344 = vpop.f32.mrf.mxu0
    %v1345 = vadd.f32 %v1279, %v1344
    %v1346 = vpop.f32.mrf.mxu0
    %1347 = vmatprep.mubr.bf16.mxu0 0
    %1348 = vmatmul.mubr.bf16.gmra.mxu0 %v1305
    %v1349 = vpop.f32.mrf.mxu0
    %v1350 = vadd.f32 %v1284, %v1349
    %v1351 = vpop.f32.mrf.mxu0
    %v1352 = vpop.f32.mrf.mxu0
    %v1353 = vadd.f32 %v1289, %v1352
    %v1354 = vpop.f32.mrf.mxu0
    %1355 = vdwg.mxu0
    %v1356 = vmax.f32 %v1342, 0.0
    %v1357 = vmax.f32 %v1345, 0.0
    %v1358 = vmax.f32 %v1350, 0.0
    %v1359 = vmax.f32 %v1353, 0.0
    %s1360 = scalar_lea.vmem %s3, 128
    %v1361 = vld [vmem:[%s1360] sm:$0xf]
    %v1362 = vld [vmem:[%s1360 + $0x4] sm:$0xf]
    %v1363 = vld [vmem:[%s1360 + $0x8] sm:$0xf]
    %v1364 = vld [vmem:[%s1360 + $0xc] sm:$0xf]
    %v1365 = vpack.c.bf16 %v1357, %v1356
    %v1366 = vpack.c.bf16 %v1359, %v1358
    %s1367 = scalar_lea.vmem %s4, 256
    %v1368 = vld [vmem:[%s1367] sm:$0xff]
    %v1369 = vld [vmem:[%s1367 + $0x8] sm:$0xff]
    %v1370 = vld [vmem:[%s1367 + $0x10] sm:$0xff]
    %v1371 = vld [vmem:[%s1367 + $0x18] sm:$0xff]
    %1373 = vset.pattern.permute.xlu0 0
    %1374 = vperm.xlu0 %1373, %v1368
    %v1375 = vpop.permute.xlu0 %1374
    %1378 = vset.pattern.permute.xlu0 0
    %1379 = vperm.xlu0 %1378, %v1369
    %v1380 = vpop.permute.xlu0 %1379
    %1383 = vset.pattern.permute.xlu0 0
    %1384 = vperm.xlu0 %1383, %v1370
    %v1385 = vpop.permute.xlu0 %1384
    %1388 = vset.pattern.permute.xlu0 0
    %1389 = vperm.xlu0 %1388, %v1371
    %v1390 = vpop.permute.xlu0 %1389
    %v1396 = vunpack.c.l.b16 %v1361
    %v1397 = vunpack.c.l.b16 %v1362
    %v1398 = vunpack.c.l.b16 %v1363
    %v1399 = vunpack.c.l.b16 %v1364
    %v1400 = vpack.c.b16 %v1397, %v1396
    %v1401 = vpack.c.b16 %v1399, %v1398
    %v1403 = vsel %vm215, %v1400, 0
    %v1406 = vsel %vm215, %v1401, 0
    %1408 = vmatprep.subr.bf16.mxu0 0
    %1409 = vmatpush1.bf16.msra.mxu0 0
    %1410 = vmatprep.subr.bf16.mxu0 0
    %1411 = vmatpush1.bf16.msra.mxu0 0
    %1412 = vmatprep.subr.bf16.mxu0 0
    %1413 = vmatpush1.bf16.msra.mxu0 0
    %1414 = vmatprep.subr.bf16.mxu0 0
    %1415 = vmatpush1.bf16.msra.mxu0 0
    %1416 = vmatprep.subr.bf16.mxu0 0
    %1417 = vmatpush1.bf16.msra.mxu0 0
    %1418 = vmatprep.subr.bf16.mxu0 0
    %1419 = vmatpush1.bf16.msra.mxu0 0
    %1420 = vmatprep.subr.bf16.mxu0 0
    %1421 = vmatpush1.bf16.msra.mxu0 %v1366
    %1422 = vmatprep.subr.bf16.mxu0 0
    %1423 = vmatpush1.bf16.msra.mxu0 %v1365
    %1424 = vmatprep.subr.bf16.mxu0 0
    %1425 = vmatpush2.bf16.msra.mxu0 0
    %1426 = vmatprep.subr.bf16.mxu0 0
    %1427 = vmatpush2.bf16.msra.mxu0 0
    %1428 = vmatprep.subr.bf16.mxu0 0
    %1429 = vmatpush2.bf16.msra.mxu0 0
    %1430 = vmatprep.subr.bf16.mxu0 0
    %1431 = vmatpush2.bf16.msra.mxu0 0
    %1432 = vmatprep.subr.bf16.mxu0 0
    %1433 = vmatpush2.bf16.msra.mxu0 0
    %1434 = vmatprep.subr.bf16.mxu0 0
    %1435 = vmatpush2.bf16.msra.mxu0 0
    %1436 = vmatprep.subr.bf16.mxu0 0
    %1437 = vmatpush2.bf16.msra.mxu0 0
    %1438 = vmatprep.subr.bf16.mxu0 0
    %1439 = vmatpush2.bf16.msra.mxu0 0
    %1440 = vmatprep.mubr.bf16.mxu0 0
    %1441 = vmatmul.mubr.bf16.gmra.mxu0 %v1403
    %v1442 = vpop.f32.mrf.mxu0
    %v1443 = vadd.f32 %v1375, %v1442
    %v1444 = vpop.f32.mrf.mxu0
    %v1445 = vpop.f32.mrf.mxu0
    %v1446 = vadd.f32 %v1380, %v1445
    %v1447 = vpop.f32.mrf.mxu0
    %1448 = vmatprep.mubr.bf16.mxu0 0
    %1449 = vmatmul.mubr.bf16.gmra.mxu0 %v1406
    %v1450 = vpop.f32.mrf.mxu0
    %v1451 = vadd.f32 %v1385, %v1450
    %v1452 = vpop.f32.mrf.mxu0
    %v1453 = vpop.f32.mrf.mxu0
    %v1454 = vadd.f32 %v1390, %v1453
    %v1455 = vpop.f32.mrf.mxu0
    %1456 = vdwg.mxu0
    %v1457 = vmax.f32 %v1443, 0.0
    %v1458 = vmax.f32 %v1446, 0.0
    %v1459 = vmax.f32 %v1451, 0.0
    %v1460 = vmax.f32 %v1454, 0.0
    %s1461 = scalar_lea.vmem %s5, 24
    %v1462 = vld [vmem:[%s1461] sm:$0xf]
    %v1463 = vld [vmem:[%s1461 + $0x4] sm:$0xf]
    %v1464 = vld [vmem:[%s1461 + $0x8] sm:$0xf]
    %v1465 = vpack.c.bf16 %v1458, %v1457
    %v1466 = vpack.c.bf16 %v1460, %v1459
    %s1467 = scalar_lea.vmem %s6, 48
    %v1468 = vld [vmem:[%s1467] sm:$0xff]
    %v1469 = vld [vmem:[%s1467 + $0x8] sm:$0xff]
    %v1470 = vld [vmem:[%s1467 + $0x10] sm:$0xff]
    %1472 = vset.pattern.permute.xlu0 0
    %1473 = vperm.xlu0 %1472, %v1468
    %v1474 = vpop.permute.xlu0 %1473
    %1476 = vset.pattern.permute.xlu0 0
    %1477 = vperm.xlu0 %1476, %v1469
    %v1478 = vpop.permute.xlu0 %1477
    %1480 = vset.pattern.permute.xlu0 0
    %1481 = vperm.xlu0 %1480, %v1470
    %v1482 = vpop.permute.xlu0 %1481
    %v1487 = vunpack.c.l.b16 %v1462
    %v1488 = vunpack.c.l.b16 %v1463
    %v1489 = vunpack.c.l.b16 %v1464
    %v1490 = vpack.c.b16 %v1488, %v1487
    %v1491 = vpack.c.b16 %v1489, %v1489
    %v1493 = vsel %vm215, %v1490, 0
    %v1496 = vsel %vm215, %v1491, 0
    %1498 = vmatprep.subr.bf16.mxu0 0
    %1499 = vmatpush1.bf16.msra.mxu0 0
    %1500 = vmatprep.subr.bf16.mxu0 0
    %1501 = vmatpush1.bf16.msra.mxu0 0
    %1502 = vmatprep.subr.bf16.mxu0 0
    %1503 = vmatpush1.bf16.msra.mxu0 0
    %1504 = vmatprep.subr.bf16.mxu0 0
    %1505 = vmatpush1.bf16.msra.mxu0 0
    %1506 = vmatprep.subr.bf16.mxu0 0
    %1507 = vmatpush1.bf16.msra.mxu0 0
    %1508 = vmatprep.subr.bf16.mxu0 0
    %1509 = vmatpush1.bf16.msra.mxu0 0
    %1510 = vmatprep.subr.bf16.mxu0 0
    %1511 = vmatpush1.bf16.msra.mxu0 %v1466
    %1512 = vmatprep.subr.bf16.mxu0 0
    %1513 = vmatpush1.bf16.msra.mxu0 %v1465
    %1514 = vmatprep.subr.bf16.mxu0 0
    %1515 = vmatpush2.bf16.msra.mxu0 0
    %1516 = vmatprep.subr.bf16.mxu0 0
    %1517 = vmatpush2.bf16.msra.mxu0 0
    %1518 = vmatprep.subr.bf16.mxu0 0
    %1519 = vmatpush2.bf16.msra.mxu0 0
    %1520 = vmatprep.subr.bf16.mxu0 0
    %1521 = vmatpush2.bf16.msra.mxu0 0
    %1522 = vmatprep.subr.bf16.mxu0 0
    %1523 = vmatpush2.bf16.msra.mxu0 0
    %1524 = vmatprep.subr.bf16.mxu0 0
    %1525 = vmatpush2.bf16.msra.mxu0 0
    %1526 = vmatprep.subr.bf16.mxu0 0
    %1527 = vmatpush2.bf16.msra.mxu0 0
    %1528 = vmatprep.subr.bf16.mxu0 0
    %1529 = vmatpush2.bf16.msra.mxu0 0
    %1530 = vmatprep.mubr.bf16.mxu0 0
    %1531 = vmatmul.mubr.bf16.gmra.mxu0 %v1493
    %v1532 = vpop.f32.mrf.mxu0
    %v1533 = vpop.f32.mrf.mxu0
    %v1534 = vpop.f32.mrf.mxu0
    %v1535 = vpop.f32.mrf.mxu0
    %1536 = vmatprep.mubr.bf16.mxu0 0
    %1537 = vmatmul.mubr.bf16.gmra.mxu0 %v1496
    %v1538 = vpop.f32.mrf.mxu0
    %v1539 = vadd.f32 %v1482, %v1538
    %v1540 = vpop.f32.mrf.mxu0
    %v1541 = vpop.f32.mrf.mxu0
    %v1542 = vpop.f32.mrf.mxu0
    %1543 = vdwg.mxu0
    %v1544 = vadd.f32 %v1057, %v1539
    %1545 = vst [vmem:[#allocation2] sm:$0x1] %v1544
    // Predicated region
    $region30: #{tpu_custom_call.1} parent=1 // pred_check
      _
    $region31: #{tpu_custom_call.1} parent=1 // pred_check_branch
      %1547 = sbr.rel (0) target = $region33
    $region32: #{tpu_custom_call.1} parent=1 // pred_region
      %s1549 = ssub.s32 16, 16
      %1550 = vsyncadd [#allocation3], %s1549
      %s1552 = sshll.u32 [#allocation2], 4
      %s1553 = int_to_ptr.vmem [resolvable:$true] %s1552
      %1555 = dma.vmem_to_hbm [thread:$0]  %s1553, 16, %s7, [#allocation3]
    $region33: #{tpu_custom_call.1} parent=1 // pred_fallthru
      _
    // Predicated region
    $region34: #{tpu_custom_call.1} parent=1 // pred_check
      _
    $region35: #{tpu_custom_call.1} parent=1 // pred_check_branch
      %1557 = sbr.rel (0) target = $region37
    $region36: #{tpu_custom_call.1} parent=1 // pred_region
      %1558 = dma.done [#allocation3], 16
    $region37: #{tpu_custom_call.1} parent=1 // pred_fallthru
      _
    %1559 = vsyncpa [#allocation3], 1

</llo_original>
